<compile_context>
chip_gen: v7x
topology: tpu7x:2x2x1
jax: 0.10.0
libtpu: 0.0.40
codegen_flags: <defaults>
</compile_context>

<pallas_src>
import jax
import jax.numpy as jnp
from jax.experimental import pallas as pl
from jax.experimental.pallas import tpu as pltpu


def _lstm_vae_kernel(x_ref, eps_ref,
                     enc_wih_ref, enc_whh_ref, enc_b_ref,
                     wml_ref, bml_ref,
                     dec_wih_ref, dec_whh_ref, dec_b_ref,
                     wo_ref, bo_ref,
                     dec_out_ref, ml_ref):
    f32 = jnp.float32
    H = enc_whh_ref.shape[0]
    B = eps_ref.shape[0]              # sublane-padded batch (multiple of 8)
    T = x_ref.shape[0] // B
    T_out = dec_out_ref.shape[0] // B

    def cell(gates, c):
        # Two full-vreg-width transcendental passes (EUP) instead of four
        # masked partial ones; PyTorch gate order (i, f, g, o).
        sig = jax.nn.sigmoid(gates)
        tg = jnp.tanh(gates)
        i = sig[:, 0 * H:1 * H]
        f = sig[:, 1 * H:2 * H]
        g = tg[:, 2 * H:3 * H]
        o = sig[:, 3 * H:4 * H]
        c_new = f * c + i * g
        h_new = o * jnp.tanh(c_new)
        return h_new, c_new

    # ---------------- encoder LSTM ----------------
    enc_whh = enc_whh_ref[...]                                        # (H, 4H) bf16
    # Hoisted input projection: one big matmul, off the recurrent critical path.
    x_gates = (jnp.dot(x_ref[...], enc_wih_ref[...],
                       preferred_element_type=f32)
               + enc_b_ref[...])                                      # (T*B, 4H) f32
    # TODO(synk): at production T*B*4H keep x_gates in bf16 to halve its VMEM
    # footprint (first array to blow the v7x 64 MiB budget).

    h = jnp.zeros((B, H), f32)
    c = jnp.zeros((B, H), f32)
    # TODO(synk): hold enc_whh/dec_whh staged in MXU weight registers across
    # the recurrence (pltpu.matmul_push_rhs / matmul_acc_lhs / matmul_pop) to
    # avoid re-pushing the same (H, 4H) RHS every step; kept as jnp.dot here
    # for portable lowering across v5e/v6e (MRF) and v7x (MRB).
    for t in range(T):                                                # static unroll
        gates = x_gates[t * B:(t + 1) * B, :] + jnp.dot(
            h.astype(enc_whh.dtype), enc_whh, preferred_element_type=f32)
        h, c = cell(gates, c)
    h_n = h

    # ---------------- fused fc_mean / fc_logvar ----------------
    # One bf16 (B, H)@(H, 2L) matmul, written as a single (B, 2L) tile; the
    # wrapper splits mean/logvar (no lane-sparse in-kernel output stores).
    ml = (jnp.dot(h_n.astype(wml_ref.dtype), wml_ref[...],
                  preferred_element_type=f32)
          + bml_ref[...])                                             # (B, 2L) f32
    ml_ref[...] = ml

    # ---------------- reparameterize ----------------
    L = ml.shape[1] // 2
    mean = ml[:, 0:L]
    logvar = ml[:, L:2 * L]
    # TODO(synk): eps (torch.randn_like) is sampled host-side with jax.random
    # instead of the in-kernel hardware PRNG.
    z = mean + eps_ref[...] * jnp.exp(0.5 * logvar)                   # (B, L) f32

    # ---------------- decoder LSTM over repeated z ----------------
    dec_whh = dec_whh_ref[...]                                        # (H, 4H) bf16
    # z is repeated across time -> its input projection is constant in t.
    z_gates = (jnp.dot(z.astype(dec_wih_ref.dtype), dec_wih_ref[...],
                       preferred_element_type=f32)
               + dec_b_ref[...])                                      # (B, 4H) f32

    h = jnp.zeros((B, H), f32)
    c = jnp.zeros((B, H), f32)
    hs = []
    for t in range(T_out):                                            # static unroll
        gates = z_gates + jnp.dot(h.astype(dec_whh.dtype), dec_whh,
                                  preferred_element_type=f32)
        h, c = cell(gates, c)
        hs.append(h)                                                  # stays in vregs

    # Deferred fc_out: h_t kept in vregs (no scratch round-trip); one
    # well-shaped matmul + a single bulk store.
    h_all = jnp.concatenate(hs, axis=0)                               # (T_out*B, H)
    dec_out_ref[...] = (jnp.dot(h_all.astype(wo_ref.dtype), wo_ref[...],
                                preferred_element_type=f32)
                        + bo_ref[...])


def init_params(key, input_dim, latent_dim, hidden_dim):
    """Deterministic synthetic parameters (PyTorch-style uniform init),
    stored pre-transposed as (in_features, out_features); biases as (1, N)."""
    H = hidden_dim
    ks = jax.random.split(key, 16)
    k_lstm = 1.0 / float(H) ** 0.5

    def unif(k, shape, bound):
        return jax.random.uniform(k, shape, jnp.float32, -bound, bound)

    params = {
        # encoder LSTM
        "enc_wih": unif(ks[0], (input_dim, 4 * H), k_lstm),
        "enc_whh": unif(ks[1], (H, 4 * H), k_lstm),
        "enc_b": unif(ks[2], (1, 4 * H), k_lstm) + unif(ks[3], (1, 4 * H), k_lstm),
        # fc_mean / fc_logvar
        "w_mean": unif(ks[4], (H, latent_dim), k_lstm),
        "b_mean": unif(ks[5], (1, latent_dim), k_lstm),
        "w_logvar": unif(ks[6], (H, latent_dim), k_lstm),
        "b_logvar": unif(ks[7], (1, latent_dim), k_lstm),
        # decoder LSTM
        "dec_wih": unif(ks[8], (latent_dim, 4 * H), k_lstm),
        "dec_whh": unif(ks[9], (H, 4 * H), k_lstm),
        "dec_b": unif(ks[10], (1, 4 * H), k_lstm) + unif(ks[11], (1, 4 * H), k_lstm),
        # fc_out
        "w_out": unif(ks[12], (H, input_dim), k_lstm),
        "b_out": unif(ks[13], (1, input_dim), k_lstm),
    }
    return params


def lstm_vae_forward(params, x, eps, seq_len):
    """x: (B, T, input_dim) batch_first (PyTorch convention).
    Returns (decoded (B, seq_len, input_dim), mean (B, L), logvar (B, L))."""
    B, T, D = x.shape
    H = params["dec_whh"].shape[0]
    L = params["w_mean"].shape[1]

    bf16 = jnp.bfloat16
    f32 = jnp.float32

    # Pad the batch to the f32 sublane granularity (8) so every per-step tile
    # and store inside the kernel is vreg-aligned.  Batch rows are independent
    # through the whole model, so padded rows are sliced off afterwards.
    SUB = 8
    Bp = max(SUB, ((B + SUB - 1) // SUB) * SUB)
    x_p = jnp.pad(x, ((0, Bp - B), (0, 0), (0, 0)))
    eps_p = jnp.pad(eps, ((0, Bp - B), (0, 0)))

    # Time-major and flattened to (T*Bp, D) in the wrapper so the kernel's
    # hoisted encoder input projection is a single matmul (no in-kernel
    # reshape across (8,128) tile boundaries).
    x_tm = jnp.transpose(x_p, (1, 0, 2)).reshape(T * Bp, D).astype(bf16)

    # Fuse fc_mean / fc_logvar into one bf16 (H, 2L) matmul.
    w_ml = jnp.concatenate([params["w_mean"], params["w_logvar"]], axis=1).astype(bf16)
    b_ml = jnp.concatenate([params["b_mean"], params["b_logvar"]], axis=1).astype(f32)

    inputs = (
        x_tm, eps_p.astype(f32),
        params["enc_wih"].astype(bf16), params["enc_whh"].astype(bf16),
        params["enc_b"].astype(f32),
        w_ml, b_ml,
        params["dec_wih"].astype(bf16), params["dec_whh"].astype(bf16),
        params["dec_b"].astype(f32),
        params["w_out"].astype(bf16), params["b_out"].astype(f32),
    )

    vmem = pl.BlockSpec(memory_space=pltpu.MemorySpace.VMEM)

    dec2d, ml = pl.pallas_call(
        _lstm_vae_kernel,
        out_shape=(
            jax.ShapeDtypeStruct((seq_len * Bp, D), f32),
            jax.ShapeDtypeStruct((Bp, 2 * L), f32),
        ),
        in_specs=[vmem] * len(inputs),
        out_specs=(vmem, vmem),
    )(*inputs)

    decoded = dec2d.reshape(seq_len, Bp, D).transpose(1, 0, 2)[:B]   # (B, T, D)
    mean = ml[:B, 0:L]
    logvar = ml[:B, L:2 * L]
    return decoded, mean, logvar


if __name__ == "__main__":
    input_dim, latent_dim, hidden_dim = 2, 2, 32
    B, T = 2, 8
    seq_len = T   # decoder length (static, like the `seq_len` arg of forward)

    key = jax.random.PRNGKey(0)
    k_param, k_x, k_eps = jax.random.split(key, 3)

    params = init_params(k_param, input_dim, latent_dim, hidden_dim)
    x = jax.random.normal(k_x, (B, T, input_dim), jnp.float32)
    eps = jax.random.normal(k_eps, (B, latent_dim), jnp.float32)

    fwd = jax.jit(lstm_vae_forward, static_argnums=3)
    decoded, mean, logvar = fwd(params, x, eps, seq_len)
    jax.block_until_ready((decoded, mean, logvar))

    assert decoded.shape == (B, seq_len, input_dim)
    assert mean.shape == (B, latent_dim)
    assert logvar.shape == (B, latent_dim)
    print("KERNEL_OK")
</pallas_src>

<mosaic_0001>
module attributes {stable_mosaic.version = 11 : i64} {
  func.func @_lstm_vae_kernel(%arg0: memref<64x2xbf16, #tpu.memory_space<vmem>>, %arg1: memref<8x2xf32, #tpu.memory_space<vmem>>, %arg2: memref<2x128xbf16, #tpu.memory_space<vmem>>, %arg3: memref<32x128xbf16, #tpu.memory_space<vmem>>, %arg4: memref<1x128xf32, #tpu.memory_space<vmem>>, %arg5: memref<32x4xbf16, #tpu.memory_space<vmem>>, %arg6: memref<1x4xf32, #tpu.memory_space<vmem>>, %arg7: memref<2x128xbf16, #tpu.memory_space<vmem>>, %arg8: memref<32x128xbf16, #tpu.memory_space<vmem>>, %arg9: memref<1x128xf32, #tpu.memory_space<vmem>>, %arg10: memref<32x2xbf16, #tpu.memory_space<vmem>>, %arg11: memref<1x2xf32, #tpu.memory_space<vmem>>, %arg12: memref<64x2xf32, #tpu.memory_space<vmem>>, %arg13: memref<8x4xf32, #tpu.memory_space<vmem>>) attributes {dimension_semantics = [], scalar_prefetch = 0 : i64, scratch_operands = 0 : i64, tpu.core_type = #tpu.core_type<tc>} {
    %c0 = arith.constant 0 : index
    %c0_0 = arith.constant 0 : index
    %0 = vector.load %arg3[%c0, %c0_0] : memref<32x128xbf16, #tpu.memory_space<vmem>>, vector<32x128xbf16>
    %c0_1 = arith.constant 0 : index
    %c0_2 = arith.constant 0 : index
    %1 = vector.load %arg0[%c0_1, %c0_2] : memref<64x2xbf16, #tpu.memory_space<vmem>>, vector<64x2xbf16>
    %c0_3 = arith.constant 0 : index
    %c0_4 = arith.constant 0 : index
    %2 = vector.load %arg2[%c0_3, %c0_4] : memref<2x128xbf16, #tpu.memory_space<vmem>>, vector<2x128xbf16>
    %cst = arith.constant dense<0.000000e+00> : vector<64x128xf32>
    %3 = tpu.matmul %1, %2, %cst {dimension_numbers = #tpu.dot_dimension_numbers<[1], [0], [0], [1], [0, 0, 1, 1], [], []>} : vector<64x2xbf16>, vector<2x128xbf16>, vector<64x128xf32> -> vector<64x128xf32>
    %c0_5 = arith.constant 0 : index
    %c0_6 = arith.constant 0 : index
    %4 = vector.load %arg4[%c0_5, %c0_6] : memref<1x128xf32, #tpu.memory_space<vmem>>, vector<1x128xf32>
    %5 = vector.broadcast %4 : vector<1x128xf32> to vector<64x128xf32>
    %6 = arith.addf %3, %5 : vector<64x128xf32>
    %cst_7 = arith.constant 0.000000e+00 : f32
    %7 = vector.broadcast %cst_7 : f32 to vector<8x32xf32>
    %cst_8 = arith.constant 0.000000e+00 : f32
    %8 = vector.broadcast %cst_8 : f32 to vector<8x32xf32>
    %9 = vector.extract_strided_slice %6 {offsets = [0, 0], sizes = [8, 128], strides = [1, 1]} : vector<64x128xf32> to vector<8x128xf32>
    %10 = arith.truncf %7 : vector<8x32xf32> to vector<8x32xbf16>
    %cst_9 = arith.constant dense<0.000000e+00> : vector<8x128xf32>
    %11 = tpu.matmul %10, %0, %cst_9 {dimension_numbers = #tpu.dot_dimension_numbers<[1], [0], [0], [1], [0, 0, 1, 1], [], []>} : vector<8x32xbf16>, vector<32x128xbf16>, vector<8x128xf32> -> vector<8x128xf32>
    %12 = arith.addf %9, %11 : vector<8x128xf32>
    %13 = arith.negf %12 : vector<8x128xf32>
    %14 = math.exp %13 : vector<8x128xf32>
    %cst_10 = arith.constant 1.000000e+00 : f32
    %15 = vector.broadcast %cst_10 : f32 to vector<8x128xf32>
    %16 = arith.addf %15, %14 : vector<8x128xf32>
    %17 = arith.divf %15, %16 : vector<8x128xf32>
    %18 = math.tanh %12 : vector<8x128xf32>
    %19 = vector.extract_strided_slice %17 {offsets = [0, 0], sizes = [8, 32], strides = [1, 1]} : vector<8x128xf32> to vector<8x32xf32>
    %20 = vector.extract_strided_slice %17 {offsets = [0, 32], sizes = [8, 32], strides = [1, 1]} : vector<8x128xf32> to vector<8x32xf32>
    %21 = vector.extract_strided_slice %18 {offsets = [0, 64], sizes = [8, 32], strides = [1, 1]} : vector<8x128xf32> to vector<8x32xf32>
    %22 = vector.extract_strided_slice %17 {offsets = [0, 96], sizes = [8, 32], strides = [1, 1]} : vector<8x128xf32> to vector<8x32xf32>
    %23 = arith.mulf %20, %8 : vector<8x32xf32>
    %24 = arith.mulf %19, %21 : vector<8x32xf32>
    %25 = arith.addf %23, %24 : vector<8x32xf32>
    %26 = math.tanh %25 : vector<8x32xf32>
    %27 = arith.mulf %22, %26 : vector<8x32xf32>
    %28 = vector.extract_strided_slice %6 {offsets = [8, 0], sizes = [8, 128], strides = [1, 1]} : vector<64x128xf32> to vector<8x128xf32>
    %29 = arith.truncf %27 : vector<8x32xf32> to vector<8x32xbf16>
    %cst_11 = arith.constant dense<0.000000e+00> : vector<8x128xf32>
    %30 = tpu.matmul %29, %0, %cst_11 {dimension_numbers = #tpu.dot_dimension_numbers<[1], [0], [0], [1], [0, 0, 1, 1], [], []>} : vector<8x32xbf16>, vector<32x128xbf16>, vector<8x128xf32> -> vector<8x128xf32>
    %31 = arith.addf %28, %30 : vector<8x128xf32>
    %32 = arith.negf %31 : vector<8x128xf32>
    %33 = math.exp %32 : vector<8x128xf32>
    %cst_12 = arith.constant 1.000000e+00 : f32
    %34 = vector.broadcast %cst_12 : f32 to vector<8x128xf32>
    %35 = arith.addf %34, %33 : vector<8x128xf32>
    %36 = arith.divf %34, %35 : vector<8x128xf32>
    %37 = math.tanh %31 : vector<8x128xf32>
    %38 = vector.extract_strided_slice %36 {offsets = [0, 0], sizes = [8, 32], strides = [1, 1]} : vector<8x128xf32> to vector<8x32xf32>
    %39 = vector.extract_strided_slice %36 {offsets = [0, 32], sizes = [8, 32], strides = [1, 1]} : vector<8x128xf32> to vector<8x32xf32>
    %40 = vector.extract_strided_slice %37 {offsets = [0, 64], sizes = [8, 32], strides = [1, 1]} : vector<8x128xf32> to vector<8x32xf32>
    %41 = vector.extract_strided_slice %36 {offsets = [0, 96], sizes = [8, 32], strides = [1, 1]} : vector<8x128xf32> to vector<8x32xf32>
    %42 = arith.mulf %39, %25 : vector<8x32xf32>
    %43 = arith.mulf %38, %40 : vector<8x32xf32>
    %44 = arith.addf %42, %43 : vector<8x32xf32>
    %45 = math.tanh %44 : vector<8x32xf32>
    %46 = arith.mulf %41, %45 : vector<8x32xf32>
    %47 = vector.extract_strided_slice %6 {offsets = [16, 0], sizes = [8, 128], strides = [1, 1]} : vector<64x128xf32> to vector<8x128xf32>
    %48 = arith.truncf %46 : vector<8x32xf32> to vector<8x32xbf16>
    %cst_13 = arith.constant dense<0.000000e+00> : vector<8x128xf32>
    %49 = tpu.matmul %48, %0, %cst_13 {dimension_numbers = #tpu.dot_dimension_numbers<[1], [0], [0], [1], [0, 0, 1, 1], [], []>} : vector<8x32xbf16>, vector<32x128xbf16>, vector<8x128xf32> -> vector<8x128xf32>
    %50 = arith.addf %47, %49 : vector<8x128xf32>
    %51 = arith.negf %50 : vector<8x128xf32>
    %52 = math.exp %51 : vector<8x128xf32>
    %cst_14 = arith.constant 1.000000e+00 : f32
    %53 = vector.broadcast %cst_14 : f32 to vector<8x128xf32>
    %54 = arith.addf %53, %52 : vector<8x128xf32>
    %55 = arith.divf %53, %54 : vector<8x128xf32>
    %56 = math.tanh %50 : vector<8x128xf32>
    %57 = vector.extract_strided_slice %55 {offsets = [0, 0], sizes = [8, 32], strides = [1, 1]} : vector<8x128xf32> to vector<8x32xf32>
    %58 = vector.extract_strided_slice %55 {offsets = [0, 32], sizes = [8, 32], strides = [1, 1]} : vector<8x128xf32> to vector<8x32xf32>
    %59 = vector.extract_strided_slice %56 {offsets = [0, 64], sizes = [8, 32], strides = [1, 1]} : vector<8x128xf32> to vector<8x32xf32>
    %60 = vector.extract_strided_slice %55 {offsets = [0, 96], sizes = [8, 32], strides = [1, 1]} : vector<8x128xf32> to vector<8x32xf32>
    %61 = arith.mulf %58, %44 : vector<8x32xf32>
    %62 = arith.mulf %57, %59 : vector<8x32xf32>
    %63 = arith.addf %61, %62 : vector<8x32xf32>
    %64 = math.tanh %63 : vector<8x32xf32>
    %65 = arith.mulf %60, %64 : vector<8x32xf32>
    %66 = vector.extract_strided_slice %6 {offsets = [24, 0], sizes = [8, 128], strides = [1, 1]} : vector<64x128xf32> to vector<8x128xf32>
    %67 = arith.truncf %65 : vector<8x32xf32> to vector<8x32xbf16>
    %cst_15 = arith.constant dense<0.000000e+00> : vector<8x128xf32>
    %68 = tpu.matmul %67, %0, %cst_15 {dimension_numbers = #tpu.dot_dimension_numbers<[1], [0], [0], [1], [0, 0, 1, 1], [], []>} : vector<8x32xbf16>, vector<32x128xbf16>, vector<8x128xf32> -> vector<8x128xf32>
    %69 = arith.addf %66, %68 : vector<8x128xf32>
    %70 = arith.negf %69 : vector<8x128xf32>
    %71 = math.exp %70 : vector<8x128xf32>
    %cst_16 = arith.constant 1.000000e+00 : f32
    %72 = vector.broadcast %cst_16 : f32 to vector<8x128xf32>
    %73 = arith.addf %72, %71 : vector<8x128xf32>
    %74 = arith.divf %72, %73 : vector<8x128xf32>
    %75 = math.tanh %69 : vector<8x128xf32>
    %76 = vector.extract_strided_slice %74 {offsets = [0, 0], sizes = [8, 32], strides = [1, 1]} : vector<8x128xf32> to vector<8x32xf32>
    %77 = vector.extract_strided_slice %74 {offsets = [0, 32], sizes = [8, 32], strides = [1, 1]} : vector<8x128xf32> to vector<8x32xf32>
    %78 = vector.extract_strided_slice %75 {offsets = [0, 64], sizes = [8, 32], strides = [1, 1]} : vector<8x128xf32> to vector<8x32xf32>
    %79 = vector.extract_strided_slice %74 {offsets = [0, 96], sizes = [8, 32], strides = [1, 1]} : vector<8x128xf32> to vector<8x32xf32>
    %80 = arith.mulf %77, %63 : vector<8x32xf32>
    %81 = arith.mulf %76, %78 : vector<8x32xf32>
    %82 = arith.addf %80, %81 : vector<8x32xf32>
    %83 = math.tanh %82 : vector<8x32xf32>
    %84 = arith.mulf %79, %83 : vector<8x32xf32>
    %85 = vector.extract_strided_slice %6 {offsets = [32, 0], sizes = [8, 128], strides = [1, 1]} : vector<64x128xf32> to vector<8x128xf32>
    %86 = arith.truncf %84 : vector<8x32xf32> to vector<8x32xbf16>
    %cst_17 = arith.constant dense<0.000000e+00> : vector<8x128xf32>
    %87 = tpu.matmul %86, %0, %cst_17 {dimension_numbers = #tpu.dot_dimension_numbers<[1], [0], [0], [1], [0, 0, 1, 1], [], []>} : vector<8x32xbf16>, vector<32x128xbf16>, vector<8x128xf32> -> vector<8x128xf32>
    %88 = arith.addf %85, %87 : vector<8x128xf32>
    %89 = arith.negf %88 : vector<8x128xf32>
    %90 = math.exp %89 : vector<8x128xf32>
    %cst_18 = arith.constant 1.000000e+00 : f32
    %91 = vector.broadcast %cst_18 : f32 to vector<8x128xf32>
    %92 = arith.addf %91, %90 : vector<8x128xf32>
    %93 = arith.divf %91, %92 : vector<8x128xf32>
    %94 = math.tanh %88 : vector<8x128xf32>
    %95 = vector.extract_strided_slice %93 {offsets = [0, 0], sizes = [8, 32], strides = [1, 1]} : vector<8x128xf32> to vector<8x32xf32>
    %96 = vector.extract_strided_slice %93 {offsets = [0, 32], sizes = [8, 32], strides = [1, 1]} : vector<8x128xf32> to vector<8x32xf32>
    %97 = vector.extract_strided_slice %94 {offsets = [0, 64], sizes = [8, 32], strides = [1, 1]} : vector<8x128xf32> to vector<8x32xf32>
    %98 = vector.extract_strided_slice %93 {offsets = [0, 96], sizes = [8, 32], strides = [1, 1]} : vector<8x128xf32> to vector<8x32xf32>
    %99 = arith.mulf %96, %82 : vector<8x32xf32>
    %100 = arith.mulf %95, %97 : vector<8x32xf32>
    %101 = arith.addf %99, %100 : vector<8x32xf32>
    %102 = math.tanh %101 : vector<8x32xf32>
    %103 = arith.mulf %98, %102 : vector<8x32xf32>
    %104 = vector.extract_strided_slice %6 {offsets = [40, 0], sizes = [8, 128], strides = [1, 1]} : vector<64x128xf32> to vector<8x128xf32>
    %105 = arith.truncf %103 : vector<8x32xf32> to vector<8x32xbf16>
    %cst_19 = arith.constant dense<0.000000e+00> : vector<8x128xf32>
    %106 = tpu.matmul %105, %0, %cst_19 {dimension_numbers = #tpu.dot_dimension_numbers<[1], [0], [0], [1], [0, 0, 1, 1], [], []>} : vector<8x32xbf16>, vector<32x128xbf16>, vector<8x128xf32> -> vector<8x128xf32>
    %107 = arith.addf %104, %106 : vector<8x128xf32>
    %108 = arith.negf %107 : vector<8x128xf32>
    %109 = math.exp %108 : vector<8x128xf32>
    %cst_20 = arith.constant 1.000000e+00 : f32
    %110 = vector.broadcast %cst_20 : f32 to vector<8x128xf32>
    %111 = arith.addf %110, %109 : vector<8x128xf32>
    %112 = arith.divf %110, %111 : vector<8x128xf32>
    %113 = math.tanh %107 : vector<8x128xf32>
    %114 = vector.extract_strided_slice %112 {offsets = [0, 0], sizes = [8, 32], strides = [1, 1]} : vector<8x128xf32> to vector<8x32xf32>
    %115 = vector.extract_strided_slice %112 {offsets = [0, 32], sizes = [8, 32], strides = [1, 1]} : vector<8x128xf32> to vector<8x32xf32>
    %116 = vector.extract_strided_slice %113 {offsets = [0, 64], sizes = [8, 32], strides = [1, 1]} : vector<8x128xf32> to vector<8x32xf32>
    %117 = vector.extract_strided_slice %112 {offsets = [0, 96], sizes = [8, 32], strides = [1, 1]} : vector<8x128xf32> to vector<8x32xf32>
    %118 = arith.mulf %115, %101 : vector<8x32xf32>
    %119 = arith.mulf %114, %116 : vector<8x32xf32>
    %120 = arith.addf %118, %119 : vector<8x32xf32>
    %121 = math.tanh %120 : vector<8x32xf32>
    %122 = arith.mulf %117, %121 : vector<8x32xf32>
    %123 = vector.extract_strided_slice %6 {offsets = [48, 0], sizes = [8, 128], strides = [1, 1]} : vector<64x128xf32> to vector<8x128xf32>
    %124 = arith.truncf %122 : vector<8x32xf32> to vector<8x32xbf16>
    %cst_21 = arith.constant dense<0.000000e+00> : vector<8x128xf32>
    %125 = tpu.matmul %124, %0, %cst_21 {dimension_numbers = #tpu.dot_dimension_numbers<[1], [0], [0], [1], [0, 0, 1, 1], [], []>} : vector<8x32xbf16>, vector<32x128xbf16>, vector<8x128xf32> -> vector<8x128xf32>
    %126 = arith.addf %123, %125 : vector<8x128xf32>
    %127 = arith.negf %126 : vector<8x128xf32>
    %128 = math.exp %127 : vector<8x128xf32>
    %cst_22 = arith.constant 1.000000e+00 : f32
    %129 = vector.broadcast %cst_22 : f32 to vector<8x128xf32>
    %130 = arith.addf %129, %128 : vector<8x128xf32>
    %131 = arith.divf %129, %130 : vector<8x128xf32>
    %132 = math.tanh %126 : vector<8x128xf32>
    %133 = vector.extract_strided_slice %131 {offsets = [0, 0], sizes = [8, 32], strides = [1, 1]} : vector<8x128xf32> to vector<8x32xf32>
    %134 = vector.extract_strided_slice %131 {offsets = [0, 32], sizes = [8, 32], strides = [1, 1]} : vector<8x128xf32> to vector<8x32xf32>
    %135 = vector.extract_strided_slice %132 {offsets = [0, 64], sizes = [8, 32], strides = [1, 1]} : vector<8x128xf32> to vector<8x32xf32>
    %136 = vector.extract_strided_slice %131 {offsets = [0, 96], sizes = [8, 32], strides = [1, 1]} : vector<8x128xf32> to vector<8x32xf32>
    %137 = arith.mulf %134, %120 : vector<8x32xf32>
    %138 = arith.mulf %133, %135 : vector<8x32xf32>
    %139 = arith.addf %137, %138 : vector<8x32xf32>
    %140 = math.tanh %139 : vector<8x32xf32>
    %141 = arith.mulf %136, %140 : vector<8x32xf32>
    %142 = vector.extract_strided_slice %6 {offsets = [56, 0], sizes = [8, 128], strides = [1, 1]} : vector<64x128xf32> to vector<8x128xf32>
    %143 = arith.truncf %141 : vector<8x32xf32> to vector<8x32xbf16>
    %cst_23 = arith.constant dense<0.000000e+00> : vector<8x128xf32>
    %144 = tpu.matmul %143, %0, %cst_23 {dimension_numbers = #tpu.dot_dimension_numbers<[1], [0], [0], [1], [0, 0, 1, 1], [], []>} : vector<8x32xbf16>, vector<32x128xbf16>, vector<8x128xf32> -> vector<8x128xf32>
    %145 = arith.addf %142, %144 : vector<8x128xf32>
    %146 = arith.negf %145 : vector<8x128xf32>
    %147 = math.exp %146 : vector<8x128xf32>
    %cst_24 = arith.constant 1.000000e+00 : f32
    %148 = vector.broadcast %cst_24 : f32 to vector<8x128xf32>
    %149 = arith.addf %148, %147 : vector<8x128xf32>
    %150 = arith.divf %148, %149 : vector<8x128xf32>
    %151 = math.tanh %145 : vector<8x128xf32>
    %152 = vector.extract_strided_slice %150 {offsets = [0, 0], sizes = [8, 32], strides = [1, 1]} : vector<8x128xf32> to vector<8x32xf32>
    %153 = vector.extract_strided_slice %150 {offsets = [0, 32], sizes = [8, 32], strides = [1, 1]} : vector<8x128xf32> to vector<8x32xf32>
    %154 = vector.extract_strided_slice %151 {offsets = [0, 64], sizes = [8, 32], strides = [1, 1]} : vector<8x128xf32> to vector<8x32xf32>
    %155 = vector.extract_strided_slice %150 {offsets = [0, 96], sizes = [8, 32], strides = [1, 1]} : vector<8x128xf32> to vector<8x32xf32>
    %156 = arith.mulf %153, %139 : vector<8x32xf32>
    %157 = arith.mulf %152, %154 : vector<8x32xf32>
    %158 = arith.addf %156, %157 : vector<8x32xf32>
    %159 = math.tanh %158 : vector<8x32xf32>
    %160 = arith.mulf %155, %159 : vector<8x32xf32>
    %161 = arith.truncf %160 : vector<8x32xf32> to vector<8x32xbf16>
    %c0_25 = arith.constant 0 : index
    %c0_26 = arith.constant 0 : index
    %162 = vector.load %arg5[%c0_25, %c0_26] : memref<32x4xbf16, #tpu.memory_space<vmem>>, vector<32x4xbf16>
    %cst_27 = arith.constant dense<0.000000e+00> : vector<8x4xf32>
    %163 = tpu.matmul %161, %162, %cst_27 {dimension_numbers = #tpu.dot_dimension_numbers<[1], [0], [0], [1], [0, 0, 1, 1], [], []>} : vector<8x32xbf16>, vector<32x4xbf16>, vector<8x4xf32> -> vector<8x4xf32>
    %c0_28 = arith.constant 0 : index
    %c0_29 = arith.constant 0 : index
    %164 = vector.load %arg6[%c0_28, %c0_29] : memref<1x4xf32, #tpu.memory_space<vmem>>, vector<1x4xf32>
    %165 = vector.broadcast %164 : vector<1x4xf32> to vector<8x4xf32>
    %166 = arith.addf %163, %165 : vector<8x4xf32>
    %c0_30 = arith.constant 0 : index
    %c0_31 = arith.constant 0 : index
    %167 = vector.load %arg13[%c0_30, %c0_31] : memref<8x4xf32, #tpu.memory_space<vmem>>, vector<8x4xf32>
    tpu.vector_store %arg13[%c0_30, %c0_31], %166 {strides = array<i32>} : memref<8x4xf32, #tpu.memory_space<vmem>>, vector<8x4xf32>,
    %168 = vector.extract_strided_slice %166 {offsets = [0, 0], sizes = [8, 2], strides = [1, 1]} : vector<8x4xf32> to vector<8x2xf32>
    %169 = vector.extract_strided_slice %166 {offsets = [0, 2], sizes = [8, 2], strides = [1, 1]} : vector<8x4xf32> to vector<8x2xf32>
    %c0_32 = arith.constant 0 : index
    %c0_33 = arith.constant 0 : index
    %170 = vector.load %arg1[%c0_32, %c0_33] : memref<8x2xf32, #tpu.memory_space<vmem>>, vector<8x2xf32>
    %cst_34 = arith.constant 5.000000e-01 : f32
    %171 = vector.broadcast %cst_34 : f32 to vector<8x2xf32>
    %172 = arith.mulf %171, %169 : vector<8x2xf32>
    %173 = math.exp %172 : vector<8x2xf32>
    %174 = arith.mulf %170, %173 : vector<8x2xf32>
    %175 = arith.addf %168, %174 : vector<8x2xf32>
    %c0_35 = arith.constant 0 : index
    %c0_36 = arith.constant 0 : index
    %176 = vector.load %arg8[%c0_35, %c0_36] : memref<32x128xbf16, #tpu.memory_space<vmem>>, vector<32x128xbf16>
    %177 = arith.truncf %175 : vector<8x2xf32> to vector<8x2xbf16>
    %c0_37 = arith.constant 0 : index
    %c0_38 = arith.constant 0 : index
    %178 = vector.load %arg7[%c0_37, %c0_38] : memref<2x128xbf16, #tpu.memory_space<vmem>>, vector<2x128xbf16>
    %cst_39 = arith.constant dense<0.000000e+00> : vector<8x128xf32>
    %179 = tpu.matmul %177, %178, %cst_39 {dimension_numbers = #tpu.dot_dimension_numbers<[1], [0], [0], [1], [0, 0, 1, 1], [], []>} : vector<8x2xbf16>, vector<2x128xbf16>, vector<8x128xf32> -> vector<8x128xf32>
    %c0_40 = arith.constant 0 : index
    %c0_41 = arith.constant 0 : index
    %180 = vector.load %arg9[%c0_40, %c0_41] : memref<1x128xf32, #tpu.memory_space<vmem>>, vector<1x128xf32>
    %181 = vector.broadcast %180 : vector<1x128xf32> to vector<8x128xf32>
    %182 = arith.addf %179, %181 : vector<8x128xf32>
    %cst_42 = arith.constant 0.000000e+00 : f32
    %183 = vector.broadcast %cst_42 : f32 to vector<8x32xf32>
    %cst_43 = arith.constant 0.000000e+00 : f32
    %184 = vector.broadcast %cst_43 : f32 to vector<8x32xf32>
    %185 = arith.truncf %183 : vector<8x32xf32> to vector<8x32xbf16>
    %cst_44 = arith.constant dense<0.000000e+00> : vector<8x128xf32>
    %186 = tpu.matmul %185, %176, %cst_44 {dimension_numbers = #tpu.dot_dimension_numbers<[1], [0], [0], [1], [0, 0, 1, 1], [], []>} : vector<8x32xbf16>, vector<32x128xbf16>, vector<8x128xf32> -> vector<8x128xf32>
    %187 = arith.addf %182, %186 : vector<8x128xf32>
    %188 = arith.negf %187 : vector<8x128xf32>
    %189 = math.exp %188 : vector<8x128xf32>
    %cst_45 = arith.constant 1.000000e+00 : f32
    %190 = vector.broadcast %cst_45 : f32 to vector<8x128xf32>
    %191 = arith.addf %190, %189 : vector<8x128xf32>
    %192 = arith.divf %190, %191 : vector<8x128xf32>
    %193 = math.tanh %187 : vector<8x128xf32>
    %194 = vector.extract_strided_slice %192 {offsets = [0, 0], sizes = [8, 32], strides = [1, 1]} : vector<8x128xf32> to vector<8x32xf32>
    %195 = vector.extract_strided_slice %192 {offsets = [0, 32], sizes = [8, 32], strides = [1, 1]} : vector<8x128xf32> to vector<8x32xf32>
    %196 = vector.extract_strided_slice %193 {offsets = [0, 64], sizes = [8, 32], strides = [1, 1]} : vector<8x128xf32> to vector<8x32xf32>
    %197 = vector.extract_strided_slice %192 {offsets = [0, 96], sizes = [8, 32], strides = [1, 1]} : vector<8x128xf32> to vector<8x32xf32>
    %198 = arith.mulf %195, %184 : vector<8x32xf32>
    %199 = arith.mulf %194, %196 : vector<8x32xf32>
    %200 = arith.addf %198, %199 : vector<8x32xf32>
    %201 = math.tanh %200 : vector<8x32xf32>
    %202 = arith.mulf %197, %201 : vector<8x32xf32>
    %203 = arith.truncf %202 : vector<8x32xf32> to vector<8x32xbf16>
    %cst_46 = arith.constant dense<0.000000e+00> : vector<8x128xf32>
    %204 = tpu.matmul %203, %176, %cst_46 {dimension_numbers = #tpu.dot_dimension_numbers<[1], [0], [0], [1], [0, 0, 1, 1], [], []>} : vector<8x32xbf16>, vector<32x128xbf16>, vector<8x128xf32> -> vector<8x128xf32>
    %205 = arith.addf %182, %204 : vector<8x128xf32>
    %206 = arith.negf %205 : vector<8x128xf32>
    %207 = math.exp %206 : vector<8x128xf32>
    %cst_47 = arith.constant 1.000000e+00 : f32
    %208 = vector.broadcast %cst_47 : f32 to vector<8x128xf32>
    %209 = arith.addf %208, %207 : vector<8x128xf32>
    %210 = arith.divf %208, %209 : vector<8x128xf32>
    %211 = math.tanh %205 : vector<8x128xf32>
    %212 = vector.extract_strided_slice %210 {offsets = [0, 0], sizes = [8, 32], strides = [1, 1]} : vector<8x128xf32> to vector<8x32xf32>
    %213 = vector.extract_strided_slice %210 {offsets = [0, 32], sizes = [8, 32], strides = [1, 1]} : vector<8x128xf32> to vector<8x32xf32>
    %214 = vector.extract_strided_slice %211 {offsets = [0, 64], sizes = [8, 32], strides = [1, 1]} : vector<8x128xf32> to vector<8x32xf32>
    %215 = vector.extract_strided_slice %210 {offsets = [0, 96], sizes = [8, 32], strides = [1, 1]} : vector<8x128xf32> to vector<8x32xf32>
    %216 = arith.mulf %213, %200 : vector<8x32xf32>
    %217 = arith.mulf %212, %214 : vector<8x32xf32>
    %218 = arith.addf %216, %217 : vector<8x32xf32>
    %219 = math.tanh %218 : vector<8x32xf32>
    %220 = arith.mulf %215, %219 : vector<8x32xf32>
    %221 = arith.truncf %220 : vector<8x32xf32> to vector<8x32xbf16>
    %cst_48 = arith.constant dense<0.000000e+00> : vector<8x128xf32>
    %222 = tpu.matmul %221, %176, %cst_48 {dimension_numbers = #tpu.dot_dimension_numbers<[1], [0], [0], [1], [0, 0, 1, 1], [], []>} : vector<8x32xbf16>, vector<32x128xbf16>, vector<8x128xf32> -> vector<8x128xf32>
    %223 = arith.addf %182, %222 : vector<8x128xf32>
    %224 = arith.negf %223 : vector<8x128xf32>
    %225 = math.exp %224 : vector<8x128xf32>
    %cst_49 = arith.constant 1.000000e+00 : f32
    %226 = vector.broadcast %cst_49 : f32 to vector<8x128xf32>
    %227 = arith.addf %226, %225 : vector<8x128xf32>
    %228 = arith.divf %226, %227 : vector<8x128xf32>
    %229 = math.tanh %223 : vector<8x128xf32>
    %230 = vector.extract_strided_slice %228 {offsets = [0, 0], sizes = [8, 32], strides = [1, 1]} : vector<8x128xf32> to vector<8x32xf32>
    %231 = vector.extract_strided_slice %228 {offsets = [0, 32], sizes = [8, 32], strides = [1, 1]} : vector<8x128xf32> to vector<8x32xf32>
    %232 = vector.extract_strided_slice %229 {offsets = [0, 64], sizes = [8, 32], strides = [1, 1]} : vector<8x128xf32> to vector<8x32xf32>
    %233 = vector.extract_strided_slice %228 {offsets = [0, 96], sizes = [8, 32], strides = [1, 1]} : vector<8x128xf32> to vector<8x32xf32>
    %234 = arith.mulf %231, %218 : vector<8x32xf32>
    %235 = arith.mulf %230, %232 : vector<8x32xf32>
    %236 = arith.addf %234, %235 : vector<8x32xf32>
    %237 = math.tanh %236 : vector<8x32xf32>
    %238 = arith.mulf %233, %237 : vector<8x32xf32>
    %239 = arith.truncf %238 : vector<8x32xf32> to vector<8x32xbf16>
    %cst_50 = arith.constant dense<0.000000e+00> : vector<8x128xf32>
    %240 = tpu.matmul %239, %176, %cst_50 {dimension_numbers = #tpu.dot_dimension_numbers<[1], [0], [0], [1], [0, 0, 1, 1], [], []>} : vector<8x32xbf16>, vector<32x128xbf16>, vector<8x128xf32> -> vector<8x128xf32>
    %241 = arith.addf %182, %240 : vector<8x128xf32>
    %242 = arith.negf %241 : vector<8x128xf32>
    %243 = math.exp %242 : vector<8x128xf32>
    %cst_51 = arith.constant 1.000000e+00 : f32
    %244 = vector.broadcast %cst_51 : f32 to vector<8x128xf32>
    %245 = arith.addf %244, %243 : vector<8x128xf32>
    %246 = arith.divf %244, %245 : vector<8x128xf32>
    %247 = math.tanh %241 : vector<8x128xf32>
    %248 = vector.extract_strided_slice %246 {offsets = [0, 0], sizes = [8, 32], strides = [1, 1]} : vector<8x128xf32> to vector<8x32xf32>
    %249 = vector.extract_strided_slice %246 {offsets = [0, 32], sizes = [8, 32], strides = [1, 1]} : vector<8x128xf32> to vector<8x32xf32>
    %250 = vector.extract_strided_slice %247 {offsets = [0, 64], sizes = [8, 32], strides = [1, 1]} : vector<8x128xf32> to vector<8x32xf32>
    %251 = vector.extract_strided_slice %246 {offsets = [0, 96], sizes = [8, 32], strides = [1, 1]} : vector<8x128xf32> to vector<8x32xf32>
    %252 = arith.mulf %249, %236 : vector<8x32xf32>
    %253 = arith.mulf %248, %250 : vector<8x32xf32>
    %254 = arith.addf %252, %253 : vector<8x32xf32>
    %255 = math.tanh %254 : vector<8x32xf32>
    %256 = arith.mulf %251, %255 : vector<8x32xf32>
    %257 = arith.truncf %256 : vector<8x32xf32> to vector<8x32xbf16>
    %cst_52 = arith.constant dense<0.000000e+00> : vector<8x128xf32>
    %258 = tpu.matmul %257, %176, %cst_52 {dimension_numbers = #tpu.dot_dimension_numbers<[1], [0], [0], [1], [0, 0, 1, 1], [], []>} : vector<8x32xbf16>, vector<32x128xbf16>, vector<8x128xf32> -> vector<8x128xf32>
    %259 = arith.addf %182, %258 : vector<8x128xf32>
    %260 = arith.negf %259 : vector<8x128xf32>
    %261 = math.exp %260 : vector<8x128xf32>
    %cst_53 = arith.constant 1.000000e+00 : f32
    %262 = vector.broadcast %cst_53 : f32 to vector<8x128xf32>
    %263 = arith.addf %262, %261 : vector<8x128xf32>
    %264 = arith.divf %262, %263 : vector<8x128xf32>
    %265 = math.tanh %259 : vector<8x128xf32>
    %266 = vector.extract_strided_slice %264 {offsets = [0, 0], sizes = [8, 32], strides = [1, 1]} : vector<8x128xf32> to vector<8x32xf32>
    %267 = vector.extract_strided_slice %264 {offsets = [0, 32], sizes = [8, 32], strides = [1, 1]} : vector<8x128xf32> to vector<8x32xf32>
    %268 = vector.extract_strided_slice %265 {offsets = [0, 64], sizes = [8, 32], strides = [1, 1]} : vector<8x128xf32> to vector<8x32xf32>
    %269 = vector.extract_strided_slice %264 {offsets = [0, 96], sizes = [8, 32], strides = [1, 1]} : vector<8x128xf32> to vector<8x32xf32>
    %270 = arith.mulf %267, %254 : vector<8x32xf32>
    %271 = arith.mulf %266, %268 : vector<8x32xf32>
    %272 = arith.addf %270, %271 : vector<8x32xf32>
    %273 = math.tanh %272 : vector<8x32xf32>
    %274 = arith.mulf %269, %273 : vector<8x32xf32>
    %275 = arith.truncf %274 : vector<8x32xf32> to vector<8x32xbf16>
    %cst_54 = arith.constant dense<0.000000e+00> : vector<8x128xf32>
    %276 = tpu.matmul %275, %176, %cst_54 {dimension_numbers = #tpu.dot_dimension_numbers<[1], [0], [0], [1], [0, 0, 1, 1], [], []>} : vector<8x32xbf16>, vector<32x128xbf16>, vector<8x128xf32> -> vector<8x128xf32>
    %277 = arith.addf %182, %276 : vector<8x128xf32>
    %278 = arith.negf %277 : vector<8x128xf32>
    %279 = math.exp %278 : vector<8x128xf32>
    %cst_55 = arith.constant 1.000000e+00 : f32
    %280 = vector.broadcast %cst_55 : f32 to vector<8x128xf32>
    %281 = arith.addf %280, %279 : vector<8x128xf32>
    %282 = arith.divf %280, %281 : vector<8x128xf32>
    %283 = math.tanh %277 : vector<8x128xf32>
    %284 = vector.extract_strided_slice %282 {offsets = [0, 0], sizes = [8, 32], strides = [1, 1]} : vector<8x128xf32> to vector<8x32xf32>
    %285 = vector.extract_strided_slice %282 {offsets = [0, 32], sizes = [8, 32], strides = [1, 1]} : vector<8x128xf32> to vector<8x32xf32>
    %286 = vector.extract_strided_slice %283 {offsets = [0, 64], sizes = [8, 32], strides = [1, 1]} : vector<8x128xf32> to vector<8x32xf32>
    %287 = vector.extract_strided_slice %282 {offsets = [0, 96], sizes = [8, 32], strides = [1, 1]} : vector<8x128xf32> to vector<8x32xf32>
    %288 = arith.mulf %285, %272 : vector<8x32xf32>
    %289 = arith.mulf %284, %286 : vector<8x32xf32>
    %290 = arith.addf %288, %289 : vector<8x32xf32>
    %291 = math.tanh %290 : vector<8x32xf32>
    %292 = arith.mulf %287, %291 : vector<8x32xf32>
    %293 = arith.truncf %292 : vector<8x32xf32> to vector<8x32xbf16>
    %cst_56 = arith.constant dense<0.000000e+00> : vector<8x128xf32>
    %294 = tpu.matmul %293, %176, %cst_56 {dimension_numbers = #tpu.dot_dimension_numbers<[1], [0], [0], [1], [0, 0, 1, 1], [], []>} : vector<8x32xbf16>, vector<32x128xbf16>, vector<8x128xf32> -> vector<8x128xf32>
    %295 = arith.addf %182, %294 : vector<8x128xf32>
    %296 = arith.negf %295 : vector<8x128xf32>
    %297 = math.exp %296 : vector<8x128xf32>
    %cst_57 = arith.constant 1.000000e+00 : f32
    %298 = vector.broadcast %cst_57 : f32 to vector<8x128xf32>
    %299 = arith.addf %298, %297 : vector<8x128xf32>
    %300 = arith.divf %298, %299 : vector<8x128xf32>
    %301 = math.tanh %295 : vector<8x128xf32>
    %302 = vector.extract_strided_slice %300 {offsets = [0, 0], sizes = [8, 32], strides = [1, 1]} : vector<8x128xf32> to vector<8x32xf32>
    %303 = vector.extract_strided_slice %300 {offsets = [0, 32], sizes = [8, 32], strides = [1, 1]} : vector<8x128xf32> to vector<8x32xf32>
    %304 = vector.extract_strided_slice %301 {offsets = [0, 64], sizes = [8, 32], strides = [1, 1]} : vector<8x128xf32> to vector<8x32xf32>
    %305 = vector.extract_strided_slice %300 {offsets = [0, 96], sizes = [8, 32], strides = [1, 1]} : vector<8x128xf32> to vector<8x32xf32>
    %306 = arith.mulf %303, %290 : vector<8x32xf32>
    %307 = arith.mulf %302, %304 : vector<8x32xf32>
    %308 = arith.addf %306, %307 : vector<8x32xf32>
    %309 = math.tanh %308 : vector<8x32xf32>
    %310 = arith.mulf %305, %309 : vector<8x32xf32>
    %311 = arith.truncf %310 : vector<8x32xf32> to vector<8x32xbf16>
    %cst_58 = arith.constant dense<0.000000e+00> : vector<8x128xf32>
    %312 = tpu.matmul %311, %176, %cst_58 {dimension_numbers = #tpu.dot_dimension_numbers<[1], [0], [0], [1], [0, 0, 1, 1], [], []>} : vector<8x32xbf16>, vector<32x128xbf16>, vector<8x128xf32> -> vector<8x128xf32>
    %313 = arith.addf %182, %312 : vector<8x128xf32>
    %314 = arith.negf %313 : vector<8x128xf32>
    %315 = math.exp %314 : vector<8x128xf32>
    %cst_59 = arith.constant 1.000000e+00 : f32
    %316 = vector.broadcast %cst_59 : f32 to vector<8x128xf32>
    %317 = arith.addf %316, %315 : vector<8x128xf32>
    %318 = arith.divf %316, %317 : vector<8x128xf32>
    %319 = math.tanh %313 : vector<8x128xf32>
    %320 = vector.extract_strided_slice %318 {offsets = [0, 0], sizes = [8, 32], strides = [1, 1]} : vector<8x128xf32> to vector<8x32xf32>
    %321 = vector.extract_strided_slice %318 {offsets = [0, 32], sizes = [8, 32], strides = [1, 1]} : vector<8x128xf32> to vector<8x32xf32>
    %322 = vector.extract_strided_slice %319 {offsets = [0, 64], sizes = [8, 32], strides = [1, 1]} : vector<8x128xf32> to vector<8x32xf32>
    %323 = vector.extract_strided_slice %318 {offsets = [0, 96], sizes = [8, 32], strides = [1, 1]} : vector<8x128xf32> to vector<8x32xf32>
    %324 = arith.mulf %321, %308 : vector<8x32xf32>
    %325 = arith.mulf %320, %322 : vector<8x32xf32>
    %326 = arith.addf %324, %325 : vector<8x32xf32>
    %327 = math.tanh %326 : vector<8x32xf32>
    %328 = arith.mulf %323, %327 : vector<8x32xf32>
    %329 = tpu.concatenate %202, %220, %238, %256, %274, %292, %310, %328 in 0 : vector<8x32xf32>, vector<8x32xf32>, vector<8x32xf32>, vector<8x32xf32>, vector<8x32xf32>, vector<8x32xf32>, vector<8x32xf32>, vector<8x32xf32> -> vector<64x32xf32>
    %330 = arith.truncf %329 : vector<64x32xf32> to vector<64x32xbf16>
    %c0_60 = arith.constant 0 : index
    %c0_61 = arith.constant 0 : index
    %331 = vector.load %arg10[%c0_60, %c0_61] : memref<32x2xbf16, #tpu.memory_space<vmem>>, vector<32x2xbf16>
    %cst_62 = arith.constant dense<0.000000e+00> : vector<64x2xf32>
    %332 = tpu.matmul %330, %331, %cst_62 {dimension_numbers = #tpu.dot_dimension_numbers<[1], [0], [0], [1], [0, 0, 1, 1], [], []>} : vector<64x32xbf16>, vector<32x2xbf16>, vector<64x2xf32> -> vector<64x2xf32>
    %c0_63 = arith.constant 0 : index
    %c0_64 = arith.constant 0 : index
    %333 = vector.load %arg11[%c0_63, %c0_64] : memref<1x2xf32, #tpu.memory_space<vmem>>, vector<1x2xf32>
    %334 = vector.broadcast %333 : vector<1x2xf32> to vector<64x2xf32>
    %335 = arith.addf %332, %334 : vector<64x2xf32>
    %c0_65 = arith.constant 0 : index
    %c0_66 = arith.constant 0 : index
    %336 = vector.load %arg12[%c0_65, %c0_66] : memref<64x2xf32, #tpu.memory_space<vmem>>, vector<64x2xf32>
    tpu.vector_store %arg12[%c0_65, %c0_66], %335 {strides = array<i32>} : memref<64x2xf32, #tpu.memory_space<vmem>>, vector<64x2xf32>,
    return
  }
}

</mosaic_0001>

<llo_original>
// kernel: lstm_vae_forward.1
$region0: #{lstm_vae_forward.1}
  #allocation0 [shape = 'u32[]', space=smem, size = 0x4, offset = 0x4, fixed_abs, tag = 'smem constant byte address 0x4 - core index']
  #allocation1 [shape = 'u32[144,128]{1,0:T(1,128)}', space=vmem, size = 0x12000, scoped, tag = 'internal scratch']
  %s0 = inlined_call_operand.vmem [shape: bf16[64,2], index: 0, kind: input, shape index: {}]
  %s1 = inlined_call_operand.vmem [shape: f32[8,2], index: 1, kind: input, shape index: {}]
  %s2 = inlined_call_operand.vmem [shape: bf16[2,128], index: 2, kind: input, shape index: {}]
  %s3 = inlined_call_operand.vmem [shape: bf16[32,128], index: 3, kind: input, shape index: {}]
  %s4 = inlined_call_operand.vmem [shape: f32[1,128], index: 4, kind: input, shape index: {}]
  %s5 = inlined_call_operand.vmem [shape: bf16[32,4], index: 5, kind: input, shape index: {}]
  %s6 = inlined_call_operand.vmem [shape: f32[1,4], index: 6, kind: input, shape index: {}]
  %s7 = inlined_call_operand.vmem [shape: bf16[2,128], index: 7, kind: input, shape index: {}]
  %s8 = inlined_call_operand.vmem [shape: bf16[32,128], index: 8, kind: input, shape index: {}]
  %s9 = inlined_call_operand.vmem [shape: f32[1,128], index: 9, kind: input, shape index: {}]
  %s10 = inlined_call_operand.vmem [shape: bf16[32,2], index: 10, kind: input, shape index: {}]
  %s11 = inlined_call_operand.vmem [shape: f32[1,2], index: 11, kind: input, shape index: {}]
  %s12 = inlined_call_operand.vmem [shape: f32[64,2], index: 12, kind: output, shape index: {0}]
  %s13 = inlined_call_operand.vmem [shape: f32[8,4], index: 13, kind: output, shape index: {1}]
  %14 = xla_tuple %s12, %s13
  %s15 = sld [smem:[#allocation0]]
  $region66: #{lstm_vae_forward.1} parent=0
    _
  %s17 = ssub.s32 1, %s15
  %s18 = scalar_select 0, %s17, %s15
  // Predicated region
  $region2: #{lstm_vae_forward.1} parent=0 // pred_check
    _
  $region3: #{lstm_vae_forward.1} parent=0 // pred_check_branch
    %20 = sbr.rel (0) target = $region5
  $region4: #{lstm_vae_forward.1} parent=0 // pred_region
    _
  $region5: #{lstm_vae_forward.1} parent=0 // pred_fallthru
    _
  // Predicated region
  $region6: #{lstm_vae_forward.1} parent=0 // pred_check
    _
  $region7: #{lstm_vae_forward.1} parent=0 // pred_check_branch
    %22 = sbr.rel (0) target = $region9
  $region8: #{lstm_vae_forward.1} parent=0 // pred_region
    _
  $region9: #{lstm_vae_forward.1} parent=0 // pred_fallthru
    _
  // Predicated region
  $region10: #{lstm_vae_forward.1} parent=0 // pred_check
    _
  $region11: #{lstm_vae_forward.1} parent=0 // pred_check_branch
    %24 = sbr.rel (0) target = $region13
  $region12: #{lstm_vae_forward.1} parent=0 // pred_region
    _
  $region13: #{lstm_vae_forward.1} parent=0 // pred_fallthru
    _
  // Predicated region
  $region14: #{lstm_vae_forward.1} parent=0 // pred_check
    _
  $region15: #{lstm_vae_forward.1} parent=0 // pred_check_branch
    %26 = sbr.rel (0) target = $region17
  $region16: #{lstm_vae_forward.1} parent=0 // pred_region
    _
  $region17: #{lstm_vae_forward.1} parent=0 // pred_fallthru
    _
  // Predicated region
  $region18: #{lstm_vae_forward.1} parent=0 // pred_check
    _
  $region19: #{lstm_vae_forward.1} parent=0 // pred_check_branch
    %28 = sbr.rel (0) target = $region21
  $region20: #{lstm_vae_forward.1} parent=0 // pred_region
    _
  $region21: #{lstm_vae_forward.1} parent=0 // pred_fallthru
    _
  // Predicated region
  $region22: #{lstm_vae_forward.1} parent=0 // pred_check
    _
  $region23: #{lstm_vae_forward.1} parent=0 // pred_check_branch
    %30 = sbr.rel (0) target = $region25
  $region24: #{lstm_vae_forward.1} parent=0 // pred_region
    _
  $region25: #{lstm_vae_forward.1} parent=0 // pred_fallthru
    _
  // Predicated region
  $region26: #{lstm_vae_forward.1} parent=0 // pred_check
    _
  $region27: #{lstm_vae_forward.1} parent=0 // pred_check_branch
    %32 = sbr.rel (0) target = $region29
  $region28: #{lstm_vae_forward.1} parent=0 // pred_region
    _
  $region29: #{lstm_vae_forward.1} parent=0 // pred_fallthru
    _
  // Predicated region
  $region30: #{lstm_vae_forward.1} parent=0 // pred_check
    _
  $region31: #{lstm_vae_forward.1} parent=0 // pred_check_branch
    %34 = sbr.rel (0) target = $region33
  $region32: #{lstm_vae_forward.1} parent=0 // pred_region
    _
  $region33: #{lstm_vae_forward.1} parent=0 // pred_fallthru
    _
  // Predicated region
  $region34: #{lstm_vae_forward.1} parent=0 // pred_check
    _
  $region35: #{lstm_vae_forward.1} parent=0 // pred_check_branch
    %36 = sbr.rel (0) target = $region37
  $region36: #{lstm_vae_forward.1} parent=0 // pred_region
    _
  $region37: #{lstm_vae_forward.1} parent=0 // pred_fallthru
    _
  // Predicated region
  $region38: #{lstm_vae_forward.1} parent=0 // pred_check
    _
  $region39: #{lstm_vae_forward.1} parent=0 // pred_check_branch
    %38 = sbr.rel (0) target = $region41
  $region40: #{lstm_vae_forward.1} parent=0 // pred_region
    _
  $region41: #{lstm_vae_forward.1} parent=0 // pred_fallthru
    _
  // Predicated region
  $region42: #{lstm_vae_forward.1} parent=0 // pred_check
    _
  $region43: #{lstm_vae_forward.1} parent=0 // pred_check_branch
    %40 = sbr.rel (0) target = $region45
  $region44: #{lstm_vae_forward.1} parent=0 // pred_region
    _
  $region45: #{lstm_vae_forward.1} parent=0 // pred_fallthru
    _
  // Predicated region
  $region46: #{lstm_vae_forward.1} parent=0 // pred_check
    _
  $region47: #{lstm_vae_forward.1} parent=0 // pred_check_branch
    %42 = sbr.rel (0) target = $region49
  $region48: #{lstm_vae_forward.1} parent=0 // pred_region
    _
  $region49: #{lstm_vae_forward.1} parent=0 // pred_fallthru
    _
  %v44 = vld [vmem:[%s3] sm:$0xf]
  %v45 = vld [vmem:[%s3 + $0x4] sm:$0xf]
  %v46 = vld [vmem:[%s3 + $0x8] sm:$0xf]
  %v47 = vld [vmem:[%s3 + $0xc] sm:$0xf]
  %v48 = vld [vmem:[%s0] sm:$0xf]
  %v49 = vld [vmem:[%s0 + $0x4] sm:$0xf]
  %v50 = vld [vmem:[%s0 + $0x8] sm:$0xf]
  %v51 = vld [vmem:[%s0 + $0xc] sm:$0xf]
  %v52 = vld [vmem:[%s0 + $0x10] sm:$0xf]
  %v53 = vld [vmem:[%s0 + $0x14] sm:$0xf]
  %v54 = vld [vmem:[%s0 + $0x18] sm:$0xf]
  %v55 = vld [vmem:[%s0 + $0x1c] sm:$0xf]
  %v56 = vld [vmem:[%s2] sm:$0x1]
  %v57 = vld [vmem:[%s4] sm:$0x1]
  %v59 = vlaneseq
  %v60 = vshrl.u32 %v59, 7
  %v61 = vsub.s32 0, %v60
  %v62 = vrot.slane %v57, %v61
  %v72 = vunpack.c.l.b16 %v48
  %v73 = vunpack.c.l.b16 %v49
  %v74 = vunpack.c.l.b16 %v50
  %v75 = vunpack.c.l.b16 %v51
  %v76 = vunpack.c.l.b16 %v52
  %v77 = vunpack.c.l.b16 %v53
  %v78 = vunpack.c.l.b16 %v54
  %v79 = vunpack.c.l.b16 %v55
  %v80 = vpack.c.b16 %v73, %v72
  %v81 = vpack.c.b16 %v75, %v74
  %v82 = vpack.c.b16 %v77, %v76
  %v83 = vpack.c.b16 %v79, %v78
  %vm84 = vcmask 15360
  %v86 = vsel %vm84, %v80, 0
  %v89 = vsel %vm84, %v81, 0
  %v92 = vsel %vm84, %v82, 0
  %v95 = vsel %vm84, %v83, 0
  %vm97 = vcmask 1040384
  %v99 = vsel %vm97, %v56, 0
  %101 = vmatprep.subr.bf16.mxu0 0
  %102 = vmatpush1.bf16.msra.mxu0 %v99
  %103 = vmatprep.subr.bf16.mxu0 0
  %104 = vmatpush1.bf16.msra.mxu0 0
  %105 = vmatprep.subr.bf16.mxu0 0
  %106 = vmatpush1.bf16.msra.mxu0 0
  %107 = vmatprep.subr.bf16.mxu0 0
  %108 = vmatpush1.bf16.msra.mxu0 0
  %109 = vmatprep.subr.bf16.mxu0 0
  %110 = vmatpush1.bf16.msra.mxu0 0
  %111 = vmatprep.subr.bf16.mxu0 0
  %112 = vmatpush1.bf16.msra.mxu0 0
  %113 = vmatprep.subr.bf16.mxu0 0
  %114 = vmatpush1.bf16.msra.mxu0 0
  %115 = vmatprep.subr.bf16.mxu0 0
  %116 = vmatpush1.bf16.msra.mxu0 0
  %117 = vmatprep.subr.bf16.mxu0 0
  %118 = vmatpush1.bf16.msra.mxu0 0
  %119 = vmatprep.subr.bf16.mxu0 0
  %120 = vmatpush1.bf16.msra.mxu0 0
  %121 = vmatprep.subr.bf16.mxu0 0
  %122 = vmatpush1.bf16.msra.mxu0 0
  %123 = vmatprep.subr.bf16.mxu0 0
  %124 = vmatpush1.bf16.msra.mxu0 0
  %125 = vmatprep.subr.bf16.mxu0 0
  %126 = vmatpush1.bf16.msra.mxu0 0
  %127 = vmatprep.subr.bf16.mxu0 0
  %128 = vmatpush1.bf16.msra.mxu0 0
  %129 = vmatprep.subr.bf16.mxu0 0
  %130 = vmatpush1.bf16.msra.mxu0 0
  %131 = vmatprep.subr.bf16.mxu0 0
  %132 = vmatpush1.bf16.msra.mxu0 0
  %133 = vmatprep.mubr.bf16.mxu0 0
  %134 = vmatmul.mubr.bf16.gmra.mrb[0].mxu0 %v86
  %v135 = vpop.f32.mrb[0].mxu0
  %v136 = vadd.f32 %v62, %v135
  %v137 = vpop.f32.mrb[0].mxu0
  %v138 = vpop.f32.mrb[0].mxu0
  %v139 = vadd.f32 %v62, %v138
  %v140 = vpop.f32.mrb[0].mxu0
  %141 = vmatprep.mubr.bf16.mxu0 0
  %142 = vmatmul.mubr.bf16.gmra.mrb[0].mxu0 %v89
  %v143 = vpop.f32.mrb[0].mxu0
  %v144 = vadd.f32 %v62, %v143
  %v145 = vpop.f32.mrb[0].mxu0
  %v146 = vpop.f32.mrb[0].mxu0
  %v147 = vadd.f32 %v62, %v146
  %v148 = vpop.f32.mrb[0].mxu0
  %149 = vmatprep.mubr.bf16.mxu0 0
  %150 = vmatmul.mubr.bf16.gmra.mrb[0].mxu0 %v92
  %v151 = vpop.f32.mrb[0].mxu0
  %v152 = vadd.f32 %v62, %v151
  %v153 = vpop.f32.mrb[0].mxu0
  %v154 = vpop.f32.mrb[0].mxu0
  %v155 = vadd.f32 %v62, %v154
  %v156 = vpop.f32.mrb[0].mxu0
  %157 = vmatprep.mubr.bf16.mxu0 0
  %158 = vmatmul.mubr.bf16.gmra.mrb[0].mxu0 %v95
  %v159 = vpop.f32.mrb[0].mxu0
  %v160 = vadd.f32 %v62, %v159
  %v161 = vpop.f32.mrb[0].mxu0
  %v162 = vpop.f32.mrb[0].mxu0
  %v163 = vadd.f32 %v62, %v162
  %v164 = vpop.f32.mrb[0].mxu0
  %165 = vdwg.mxu0
  %v170 = vunpack.c.l.b16 %v44
  %v171 = vunpack.c.l.b16 %v45
  %v172 = vunpack.c.l.b16 %v46
  %v173 = vunpack.c.l.b16 %v47
  %v174 = vpack.c.b16 %v171, %v170
  %v175 = vpack.c.b16 %v173, %v172
  %vm178 = vcmask 261120
  %v180 = vsel %vm178, 0, 0
  %182 = vmatprep.subr.bf16.mxu0 0
  %183 = vmatpush1.bf16.msra.mxu0 %v174
  %184 = vmatprep.subr.bf16.mxu0 0
  %185 = vmatpush1.bf16.msra.mxu0 %v175
  %186 = vmatprep.subr.bf16.mxu0 0
  %187 = vmatpush1.bf16.msra.mxu0 0
  %188 = vmatprep.subr.bf16.mxu0 0
  %189 = vmatpush1.bf16.msra.mxu0 0
  %190 = vmatprep.subr.bf16.mxu0 0
  %191 = vmatpush1.bf16.msra.mxu0 0
  %192 = vmatprep.subr.bf16.mxu0 0
  %193 = vmatpush1.bf16.msra.mxu0 0
  %194 = vmatprep.subr.bf16.mxu0 0
  %195 = vmatpush1.bf16.msra.mxu0 0
  %196 = vmatprep.subr.bf16.mxu0 0
  %197 = vmatpush1.bf16.msra.mxu0 0
  %198 = vmatprep.subr.bf16.mxu0 0
  %199 = vmatpush1.bf16.msra.mxu0 0
  %200 = vmatprep.subr.bf16.mxu0 0
  %201 = vmatpush1.bf16.msra.mxu0 0
  %202 = vmatprep.subr.bf16.mxu0 0
  %203 = vmatpush1.bf16.msra.mxu0 0
  %204 = vmatprep.subr.bf16.mxu0 0
  %205 = vmatpush1.bf16.msra.mxu0 0
  %206 = vmatprep.subr.bf16.mxu0 0
  %207 = vmatpush1.bf16.msra.mxu0 0
  %208 = vmatprep.subr.bf16.mxu0 0
  %209 = vmatpush1.bf16.msra.mxu0 0
  %210 = vmatprep.subr.bf16.mxu0 0
  %211 = vmatpush1.bf16.msra.mxu0 0
  %212 = vmatprep.subr.bf16.mxu0 0
  %213 = vmatpush1.bf16.msra.mxu0 0
  %214 = vmatprep.mubr.bf16.mxu0 0
  %215 = vmatmul.mubr.bf16.gmra.mrb[0].mxu0 %v180
  %v216 = vpop.f32.mrb[0].mxu0
  %v217 = vadd.f32 0.0, %v216
  %v218 = vpop.f32.mrb[0].mxu0
  %v219 = vpop.f32.mrb[0].mxu0
  %v220 = vpop.f32.mrb[0].mxu0
  %221 = vdwg.mxu0
  %v222 = vadd.f32 %v136, %v217
  %v223 = vxor.u32 %v222, 2147483648
  %v224 = vmul.f32 %v223, 1.442695
  %v225 = vpow.pop %v224
  %v226 = vadd.f32 %v225, 1.0
  %v227 = vrcp.pop %v226
  %v228 = vmul.f32 1.0, %v227
  %v229 = vtanh.pop %v222
  %v230 = vmul.f32 %v228, 0.0
  %232 = vrot.lane.b32.xlu0 %v229, 64
  %v233 = vpop.permute.xlu0 %232
  %v235 = vmul.f32 %v228, %v233
  %237 = vrot.lane.b32.xlu0 %v235, 32
  %v238 = vpop.permute.xlu0 %237
  %v240 = vadd.f32 %v230, %v238
  %v241 = vtanh.pop %v240
  %243 = vrot.lane.b32.xlu0 %v241, 64
  %v244 = vpop.permute.xlu0 %243
  %v246 = vmul.f32 %v228, %v244
  %v247 = vpack.c.bf16 %v246, %v246
  %249 = vrot.lane.b32.xlu0 %v247, 32
  %v250 = vpop.permute.xlu0 %249
  %v252 = vsel %vm178, %v250, 0
  %254 = vmatprep.subr.bf16.mxu0 0
  %255 = vmatpush1.bf16.msra.mxu0 %v174
  %256 = vmatprep.subr.bf16.mxu0 0
  %257 = vmatpush1.bf16.msra.mxu0 %v175
  %258 = vmatprep.subr.bf16.mxu0 0
  %259 = vmatpush1.bf16.msra.mxu0 0
  %260 = vmatprep.subr.bf16.mxu0 0
  %261 = vmatpush1.bf16.msra.mxu0 0
  %262 = vmatprep.subr.bf16.mxu0 0
  %263 = vmatpush1.bf16.msra.mxu0 0
  %264 = vmatprep.subr.bf16.mxu0 0
  %265 = vmatpush1.bf16.msra.mxu0 0
  %266 = vmatprep.subr.bf16.mxu0 0
  %267 = vmatpush1.bf16.msra.mxu0 0
  %268 = vmatprep.subr.bf16.mxu0 0
  %269 = vmatpush1.bf16.msra.mxu0 0
  %270 = vmatprep.subr.bf16.mxu0 0
  %271 = vmatpush1.bf16.msra.mxu0 0
  %272 = vmatprep.subr.bf16.mxu0 0
  %273 = vmatpush1.bf16.msra.mxu0 0
  %274 = vmatprep.subr.bf16.mxu0 0
  %275 = vmatpush1.bf16.msra.mxu0 0
  %276 = vmatprep.subr.bf16.mxu0 0
  %277 = vmatpush1.bf16.msra.mxu0 0
  %278 = vmatprep.subr.bf16.mxu0 0
  %279 = vmatpush1.bf16.msra.mxu0 0
  %280 = vmatprep.subr.bf16.mxu0 0
  %281 = vmatpush1.bf16.msra.mxu0 0
  %282 = vmatprep.subr.bf16.mxu0 0
  %283 = vmatpush1.bf16.msra.mxu0 0
  %284 = vmatprep.subr.bf16.mxu0 0
  %285 = vmatpush1.bf16.msra.mxu0 0
  %286 = vmatprep.mubr.bf16.mxu0 0
  %287 = vmatmul.mubr.bf16.gmra.mrb[0].mxu0 %v252
  %v288 = vpop.f32.mrb[0].mxu0
  %v289 = vadd.f32 0.0, %v288
  %v290 = vpop.f32.mrb[0].mxu0
  %v291 = vpop.f32.mrb[0].mxu0
  %v292 = vpop.f32.mrb[0].mxu0
  %293 = vdwg.mxu0
  %v294 = vadd.f32 %v139, %v289
  %v295 = vxor.u32 %v294, 2147483648
  %v296 = vmul.f32 %v295, 1.442695
  %v297 = vpow.pop %v296
  %v298 = vadd.f32 %v297, 1.0
  %v299 = vrcp.pop %v298
  %v300 = vmul.f32 1.0, %v299
  %v301 = vtanh.pop %v294
  %v302 = vmul.f32 %v300, %v240
  %304 = vrot.lane.b32.xlu0 %v301, 64
  %v305 = vpop.permute.xlu0 %304
  %v307 = vmul.f32 %v300, %v305
  %309 = vrot.lane.b32.xlu0 %v307, 32
  %v310 = vpop.permute.xlu0 %309
  %v312 = vadd.f32 %v302, %v310
  %v313 = vtanh.pop %v312
  %315 = vrot.lane.b32.xlu0 %v313, 64
  %v316 = vpop.permute.xlu0 %315
  %v318 = vmul.f32 %v300, %v316
  %v319 = vpack.c.bf16 %v318, %v318
  %321 = vrot.lane.b32.xlu0 %v319, 32
  %v322 = vpop.permute.xlu0 %321
  %v324 = vsel %vm178, %v322, 0
  %326 = vmatprep.subr.bf16.mxu0 0
  %327 = vmatpush1.bf16.msra.mxu0 %v174
  %328 = vmatprep.subr.bf16.mxu0 0
  %329 = vmatpush1.bf16.msra.mxu0 %v175
  %330 = vmatprep.subr.bf16.mxu0 0
  %331 = vmatpush1.bf16.msra.mxu0 0
  %332 = vmatprep.subr.bf16.mxu0 0
  %333 = vmatpush1.bf16.msra.mxu0 0
  %334 = vmatprep.subr.bf16.mxu0 0
  %335 = vmatpush1.bf16.msra.mxu0 0
  %336 = vmatprep.subr.bf16.mxu0 0
  %337 = vmatpush1.bf16.msra.mxu0 0
  %338 = vmatprep.subr.bf16.mxu0 0
  %339 = vmatpush1.bf16.msra.mxu0 0
  %340 = vmatprep.subr.bf16.mxu0 0
  %341 = vmatpush1.bf16.msra.mxu0 0
  %342 = vmatprep.subr.bf16.mxu0 0
  %343 = vmatpush1.bf16.msra.mxu0 0
  %344 = vmatprep.subr.bf16.mxu0 0
  %345 = vmatpush1.bf16.msra.mxu0 0
  %346 = vmatprep.subr.bf16.mxu0 0
  %347 = vmatpush1.bf16.msra.mxu0 0
  %348 = vmatprep.subr.bf16.mxu0 0
  %349 = vmatpush1.bf16.msra.mxu0 0
  %350 = vmatprep.subr.bf16.mxu0 0
  %351 = vmatpush1.bf16.msra.mxu0 0
  %352 = vmatprep.subr.bf16.mxu0 0
  %353 = vmatpush1.bf16.msra.mxu0 0
  %354 = vmatprep.subr.bf16.mxu0 0
  %355 = vmatpush1.bf16.msra.mxu0 0
  %356 = vmatprep.subr.bf16.mxu0 0
  %357 = vmatpush1.bf16.msra.mxu0 0
  %358 = vmatprep.mubr.bf16.mxu0 0
  %359 = vmatmul.mubr.bf16.gmra.mrb[0].mxu0 %v324
  %v360 = vpop.f32.mrb[0].mxu0
  %v361 = vadd.f32 0.0, %v360
  %v362 = vpop.f32.mrb[0].mxu0
  %v363 = vpop.f32.mrb[0].mxu0
  %v364 = vpop.f32.mrb[0].mxu0
  %365 = vdwg.mxu0
  %v366 = vadd.f32 %v144, %v361
  %v367 = vxor.u32 %v366, 2147483648
  %v368 = vmul.f32 %v367, 1.442695
  %v369 = vpow.pop %v368
  %v370 = vadd.f32 %v369, 1.0
  %v371 = vrcp.pop %v370
  %v372 = vmul.f32 1.0, %v371
  %v373 = vtanh.pop %v366
  %v374 = vmul.f32 %v372, %v312
  %376 = vrot.lane.b32.xlu0 %v373, 64
  %v377 = vpop.permute.xlu0 %376
  %v379 = vmul.f32 %v372, %v377
  %381 = vrot.lane.b32.xlu0 %v379, 32
  %v382 = vpop.permute.xlu0 %381
  %v384 = vadd.f32 %v374, %v382
  %v385 = vtanh.pop %v384
  %387 = vrot.lane.b32.xlu0 %v385, 64
  %v388 = vpop.permute.xlu0 %387
  %v390 = vmul.f32 %v372, %v388
  %v391 = vpack.c.bf16 %v390, %v390
  %393 = vrot.lane.b32.xlu0 %v391, 32
  %v394 = vpop.permute.xlu0 %393
  %v396 = vsel %vm178, %v394, 0
  %398 = vmatprep.subr.bf16.mxu0 0
  %399 = vmatpush1.bf16.msra.mxu0 %v174
  %400 = vmatprep.subr.bf16.mxu0 0
  %401 = vmatpush1.bf16.msra.mxu0 %v175
  %402 = vmatprep.subr.bf16.mxu0 0
  %403 = vmatpush1.bf16.msra.mxu0 0
  %404 = vmatprep.subr.bf16.mxu0 0
  %405 = vmatpush1.bf16.msra.mxu0 0
  %406 = vmatprep.subr.bf16.mxu0 0
  %407 = vmatpush1.bf16.msra.mxu0 0
  %408 = vmatprep.subr.bf16.mxu0 0
  %409 = vmatpush1.bf16.msra.mxu0 0
  %410 = vmatprep.subr.bf16.mxu0 0
  %411 = vmatpush1.bf16.msra.mxu0 0
  %412 = vmatprep.subr.bf16.mxu0 0
  %413 = vmatpush1.bf16.msra.mxu0 0
  %414 = vmatprep.subr.bf16.mxu0 0
  %415 = vmatpush1.bf16.msra.mxu0 0
  %416 = vmatprep.subr.bf16.mxu0 0
  %417 = vmatpush1.bf16.msra.mxu0 0
  %418 = vmatprep.subr.bf16.mxu0 0
  %419 = vmatpush1.bf16.msra.mxu0 0
  %420 = vmatprep.subr.bf16.mxu0 0
  %421 = vmatpush1.bf16.msra.mxu0 0
  %422 = vmatprep.subr.bf16.mxu0 0
  %423 = vmatpush1.bf16.msra.mxu0 0
  %424 = vmatprep.subr.bf16.mxu0 0
  %425 = vmatpush1.bf16.msra.mxu0 0
  %426 = vmatprep.subr.bf16.mxu0 0
  %427 = vmatpush1.bf16.msra.mxu0 0
  %428 = vmatprep.subr.bf16.mxu0 0
  %429 = vmatpush1.bf16.msra.mxu0 0
  %430 = vmatprep.mubr.bf16.mxu0 0
  %431 = vmatmul.mubr.bf16.gmra.mrb[0].mxu0 %v396
  %v432 = vpop.f32.mrb[0].mxu0
  %v433 = vadd.f32 0.0, %v432
  %v434 = vpop.f32.mrb[0].mxu0
  %v435 = vpop.f32.mrb[0].mxu0
  %v436 = vpop.f32.mrb[0].mxu0
  %437 = vdwg.mxu0
  %v438 = vadd.f32 %v147, %v433
  %v439 = vxor.u32 %v438, 2147483648
  %v440 = vmul.f32 %v439, 1.442695
  %v441 = vpow.pop %v440
  %v442 = vadd.f32 %v441, 1.0
  %v443 = vrcp.pop %v442
  %v444 = vmul.f32 1.0, %v443
  %v445 = vtanh.pop %v438
  %v446 = vmul.f32 %v444, %v384
  %448 = vrot.lane.b32.xlu0 %v445, 64
  %v449 = vpop.permute.xlu0 %448
  %v451 = vmul.f32 %v444, %v449
  %453 = vrot.lane.b32.xlu0 %v451, 32
  %v454 = vpop.permute.xlu0 %453
  %v456 = vadd.f32 %v446, %v454
  %v457 = vtanh.pop %v456
  %459 = vrot.lane.b32.xlu0 %v457, 64
  %v460 = vpop.permute.xlu0 %459
  %v462 = vmul.f32 %v444, %v460
  %v463 = vpack.c.bf16 %v462, %v462
  %465 = vrot.lane.b32.xlu0 %v463, 32
  %v466 = vpop.permute.xlu0 %465
  %v468 = vsel %vm178, %v466, 0
  %470 = vmatprep.subr.bf16.mxu0 0
  %471 = vmatpush1.bf16.msra.mxu0 %v174
  %472 = vmatprep.subr.bf16.mxu0 0
  %473 = vmatpush1.bf16.msra.mxu0 %v175
  %474 = vmatprep.subr.bf16.mxu0 0
  %475 = vmatpush1.bf16.msra.mxu0 0
  %476 = vmatprep.subr.bf16.mxu0 0
  %477 = vmatpush1.bf16.msra.mxu0 0
  %478 = vmatprep.subr.bf16.mxu0 0
  %479 = vmatpush1.bf16.msra.mxu0 0
  %480 = vmatprep.subr.bf16.mxu0 0
  %481 = vmatpush1.bf16.msra.mxu0 0
  %482 = vmatprep.subr.bf16.mxu0 0
  %483 = vmatpush1.bf16.msra.mxu0 0
  %484 = vmatprep.subr.bf16.mxu0 0
  %485 = vmatpush1.bf16.msra.mxu0 0
  %486 = vmatprep.subr.bf16.mxu0 0
  %487 = vmatpush1.bf16.msra.mxu0 0
  %488 = vmatprep.subr.bf16.mxu0 0
  %489 = vmatpush1.bf16.msra.mxu0 0
  %490 = vmatprep.subr.bf16.mxu0 0
  %491 = vmatpush1.bf16.msra.mxu0 0
  %492 = vmatprep.subr.bf16.mxu0 0
  %493 = vmatpush1.bf16.msra.mxu0 0
  %494 = vmatprep.subr.bf16.mxu0 0
  %495 = vmatpush1.bf16.msra.mxu0 0
  %496 = vmatprep.subr.bf16.mxu0 0
  %497 = vmatpush1.bf16.msra.mxu0 0
  %498 = vmatprep.subr.bf16.mxu0 0
  %499 = vmatpush1.bf16.msra.mxu0 0
  %500 = vmatprep.subr.bf16.mxu0 0
  %501 = vmatpush1.bf16.msra.mxu0 0
  %502 = vmatprep.mubr.bf16.mxu0 0
  %503 = vmatmul.mubr.bf16.gmra.mrb[0].mxu0 %v468
  %v504 = vpop.f32.mrb[0].mxu0
  %v505 = vadd.f32 0.0, %v504
  %v506 = vpop.f32.mrb[0].mxu0
  %v507 = vpop.f32.mrb[0].mxu0
  %v508 = vpop.f32.mrb[0].mxu0
  %509 = vdwg.mxu0
  %v510 = vadd.f32 %v152, %v505
  %v511 = vxor.u32 %v510, 2147483648
  %v512 = vmul.f32 %v511, 1.442695
  %v513 = vpow.pop %v512
  %v514 = vadd.f32 %v513, 1.0
  %v515 = vrcp.pop %v514
  %v516 = vmul.f32 1.0, %v515
  %v517 = vtanh.pop %v510
  %v518 = vmul.f32 %v516, %v456
  %520 = vrot.lane.b32.xlu0 %v517, 64
  %v521 = vpop.permute.xlu0 %520
  %v523 = vmul.f32 %v516, %v521
  %525 = vrot.lane.b32.xlu0 %v523, 32
  %v526 = vpop.permute.xlu0 %525
  %v528 = vadd.f32 %v518, %v526
  %v529 = vtanh.pop %v528
  %531 = vrot.lane.b32.xlu0 %v529, 64
  %v532 = vpop.permute.xlu0 %531
  %v534 = vmul.f32 %v516, %v532
  %v535 = vpack.c.bf16 %v534, %v534
  %537 = vrot.lane.b32.xlu0 %v535, 32
  %v538 = vpop.permute.xlu0 %537
  %v540 = vsel %vm178, %v538, 0
  %542 = vmatprep.subr.bf16.mxu0 0
  %543 = vmatpush1.bf16.msra.mxu0 %v174
  %544 = vmatprep.subr.bf16.mxu0 0
  %545 = vmatpush1.bf16.msra.mxu0 %v175
  %546 = vmatprep.subr.bf16.mxu0 0
  %547 = vmatpush1.bf16.msra.mxu0 0
  %548 = vmatprep.subr.bf16.mxu0 0
  %549 = vmatpush1.bf16.msra.mxu0 0
  %550 = vmatprep.subr.bf16.mxu0 0
  %551 = vmatpush1.bf16.msra.mxu0 0
  %552 = vmatprep.subr.bf16.mxu0 0
  %553 = vmatpush1.bf16.msra.mxu0 0
  %554 = vmatprep.subr.bf16.mxu0 0
  %555 = vmatpush1.bf16.msra.mxu0 0
  %556 = vmatprep.subr.bf16.mxu0 0
  %557 = vmatpush1.bf16.msra.mxu0 0
  %558 = vmatprep.subr.bf16.mxu0 0
  %559 = vmatpush1.bf16.msra.mxu0 0
  %560 = vmatprep.subr.bf16.mxu0 0
  %561 = vmatpush1.bf16.msra.mxu0 0
  %562 = vmatprep.subr.bf16.mxu0 0
  %563 = vmatpush1.bf16.msra.mxu0 0
  %564 = vmatprep.subr.bf16.mxu0 0
  %565 = vmatpush1.bf16.msra.mxu0 0
  %566 = vmatprep.subr.bf16.mxu0 0
  %567 = vmatpush1.bf16.msra.mxu0 0
  %568 = vmatprep.subr.bf16.mxu0 0
  %569 = vmatpush1.bf16.msra.mxu0 0
  %570 = vmatprep.subr.bf16.mxu0 0
  %571 = vmatpush1.bf16.msra.mxu0 0
  %572 = vmatprep.subr.bf16.mxu0 0
  %573 = vmatpush1.bf16.msra.mxu0 0
  %574 = vmatprep.mubr.bf16.mxu0 0
  %575 = vmatmul.mubr.bf16.gmra.mrb[0].mxu0 %v540
  %v576 = vpop.f32.mrb[0].mxu0
  %v577 = vadd.f32 0.0, %v576
  %v578 = vpop.f32.mrb[0].mxu0
  %v579 = vpop.f32.mrb[0].mxu0
  %v580 = vpop.f32.mrb[0].mxu0
  %581 = vdwg.mxu0
  %v582 = vadd.f32 %v155, %v577
  %v583 = vxor.u32 %v582, 2147483648
  %v584 = vmul.f32 %v583, 1.442695
  %v585 = vpow.pop %v584
  %v586 = vadd.f32 %v585, 1.0
  %v587 = vrcp.pop %v586
  %v588 = vmul.f32 1.0, %v587
  %v589 = vtanh.pop %v582
  %v590 = vmul.f32 %v588, %v528
  %592 = vrot.lane.b32.xlu0 %v589, 64
  %v593 = vpop.permute.xlu0 %592
  %v595 = vmul.f32 %v588, %v593
  %597 = vrot.lane.b32.xlu0 %v595, 32
  %v598 = vpop.permute.xlu0 %597
  %v600 = vadd.f32 %v590, %v598
  %v601 = vtanh.pop %v600
  %603 = vrot.lane.b32.xlu0 %v601, 64
  %v604 = vpop.permute.xlu0 %603
  %v606 = vmul.f32 %v588, %v604
  %v607 = vpack.c.bf16 %v606, %v606
  %609 = vrot.lane.b32.xlu0 %v607, 32
  %v610 = vpop.permute.xlu0 %609
  %v612 = vsel %vm178, %v610, 0
  %614 = vmatprep.subr.bf16.mxu0 0
  %615 = vmatpush1.bf16.msra.mxu0 %v174
  %616 = vmatprep.subr.bf16.mxu0 0
  %617 = vmatpush1.bf16.msra.mxu0 %v175
  %618 = vmatprep.subr.bf16.mxu0 0
  %619 = vmatpush1.bf16.msra.mxu0 0
  %620 = vmatprep.subr.bf16.mxu0 0
  %621 = vmatpush1.bf16.msra.mxu0 0
  %622 = vmatprep.subr.bf16.mxu0 0
  %623 = vmatpush1.bf16.msra.mxu0 0
  %624 = vmatprep.subr.bf16.mxu0 0
  %625 = vmatpush1.bf16.msra.mxu0 0
  %626 = vmatprep.subr.bf16.mxu0 0
  %627 = vmatpush1.bf16.msra.mxu0 0
  %628 = vmatprep.subr.bf16.mxu0 0
  %629 = vmatpush1.bf16.msra.mxu0 0
  %630 = vmatprep.subr.bf16.mxu0 0
  %631 = vmatpush1.bf16.msra.mxu0 0
  %632 = vmatprep.subr.bf16.mxu0 0
  %633 = vmatpush1.bf16.msra.mxu0 0
  %634 = vmatprep.subr.bf16.mxu0 0
  %635 = vmatpush1.bf16.msra.mxu0 0
  %636 = vmatprep.subr.bf16.mxu0 0
  %637 = vmatpush1.bf16.msra.mxu0 0
  %638 = vmatprep.subr.bf16.mxu0 0
  %639 = vmatpush1.bf16.msra.mxu0 0
  %640 = vmatprep.subr.bf16.mxu0 0
  %641 = vmatpush1.bf16.msra.mxu0 0
  %642 = vmatprep.subr.bf16.mxu0 0
  %643 = vmatpush1.bf16.msra.mxu0 0
  %644 = vmatprep.subr.bf16.mxu0 0
  %645 = vmatpush1.bf16.msra.mxu0 0
  %646 = vmatprep.mubr.bf16.mxu0 0
  %647 = vmatmul.mubr.bf16.gmra.mrb[0].mxu0 %v612
  %v648 = vpop.f32.mrb[0].mxu0
  %v649 = vadd.f32 0.0, %v648
  %v650 = vpop.f32.mrb[0].mxu0
  %v651 = vpop.f32.mrb[0].mxu0
  %v652 = vpop.f32.mrb[0].mxu0
  %653 = vdwg.mxu0
  %v654 = vadd.f32 %v160, %v649
  %v655 = vxor.u32 %v654, 2147483648
  %v656 = vmul.f32 %v655, 1.442695
  %v657 = vpow.pop %v656
  %v658 = vadd.f32 %v657, 1.0
  %v659 = vrcp.pop %v658
  %v660 = vmul.f32 1.0, %v659
  %v661 = vtanh.pop %v654
  %v662 = vmul.f32 %v660, %v600
  %664 = vrot.lane.b32.xlu0 %v661, 64
  %v665 = vpop.permute.xlu0 %664
  %v667 = vmul.f32 %v660, %v665
  %669 = vrot.lane.b32.xlu0 %v667, 32
  %v670 = vpop.permute.xlu0 %669
  %v672 = vadd.f32 %v662, %v670
  %v673 = vtanh.pop %v672
  %675 = vrot.lane.b32.xlu0 %v673, 64
  %v676 = vpop.permute.xlu0 %675
  %v678 = vmul.f32 %v660, %v676
  %v679 = vpack.c.bf16 %v678, %v678
  %681 = vrot.lane.b32.xlu0 %v679, 32
  %v682 = vpop.permute.xlu0 %681
  %v684 = vsel %vm178, %v682, 0
  %686 = vmatprep.subr.bf16.mxu0 0
  %687 = vmatpush1.bf16.msra.mxu0 %v174
  %688 = vmatprep.subr.bf16.mxu0 0
  %689 = vmatpush1.bf16.msra.mxu0 %v175
  %690 = vmatprep.subr.bf16.mxu0 0
  %691 = vmatpush1.bf16.msra.mxu0 0
  %692 = vmatprep.subr.bf16.mxu0 0
  %693 = vmatpush1.bf16.msra.mxu0 0
  %694 = vmatprep.subr.bf16.mxu0 0
  %695 = vmatpush1.bf16.msra.mxu0 0
  %696 = vmatprep.subr.bf16.mxu0 0
  %697 = vmatpush1.bf16.msra.mxu0 0
  %698 = vmatprep.subr.bf16.mxu0 0
  %699 = vmatpush1.bf16.msra.mxu0 0
  %700 = vmatprep.subr.bf16.mxu0 0
  %701 = vmatpush1.bf16.msra.mxu0 0
  %702 = vmatprep.subr.bf16.mxu0 0
  %703 = vmatpush1.bf16.msra.mxu0 0
  %704 = vmatprep.subr.bf16.mxu0 0
  %705 = vmatpush1.bf16.msra.mxu0 0
  %706 = vmatprep.subr.bf16.mxu0 0
  %707 = vmatpush1.bf16.msra.mxu0 0
  %708 = vmatprep.subr.bf16.mxu0 0
  %709 = vmatpush1.bf16.msra.mxu0 0
  %710 = vmatprep.subr.bf16.mxu0 0
  %711 = vmatpush1.bf16.msra.mxu0 0
  %712 = vmatprep.subr.bf16.mxu0 0
  %713 = vmatpush1.bf16.msra.mxu0 0
  %714 = vmatprep.subr.bf16.mxu0 0
  %715 = vmatpush1.bf16.msra.mxu0 0
  %716 = vmatprep.subr.bf16.mxu0 0
  %717 = vmatpush1.bf16.msra.mxu0 0
  %718 = vmatprep.mubr.bf16.mxu0 0
  %719 = vmatmul.mubr.bf16.gmra.mrb[0].mxu0 %v684
  %v720 = vpop.f32.mrb[0].mxu0
  %v721 = vadd.f32 0.0, %v720
  %v722 = vpop.f32.mrb[0].mxu0
  %v723 = vpop.f32.mrb[0].mxu0
  %v724 = vpop.f32.mrb[0].mxu0
  %725 = vdwg.mxu0
  %v726 = vadd.f32 %v163, %v721
  %v727 = vxor.u32 %v726, 2147483648
  %v728 = vmul.f32 %v727, 1.442695
  %v729 = vpow.pop %v728
  %v730 = vadd.f32 %v729, 1.0
  %v731 = vrcp.pop %v730
  %v732 = vmul.f32 1.0, %v731
  %v733 = vtanh.pop %v726
  %v734 = vmul.f32 %v732, %v672
  %736 = vrot.lane.b32.xlu0 %v733, 64
  %v737 = vpop.permute.xlu0 %736
  %v739 = vmul.f32 %v732, %v737
  %741 = vrot.lane.b32.xlu0 %v739, 32
  %v742 = vpop.permute.xlu0 %741
  %v744 = vadd.f32 %v734, %v742
  %v745 = vtanh.pop %v744
  %747 = vrot.lane.b32.xlu0 %v745, 64
  %v748 = vpop.permute.xlu0 %747
  %v750 = vmul.f32 %v732, %v748
  %v751 = vpack.c.bf16 %v750, %v750
  %v752 = vld [vmem:[%s5] sm:$0xf]
  %v753 = vld [vmem:[%s5 + $0x4] sm:$0xf]
  %v754 = vld [vmem:[%s5 + $0x8] sm:$0xf]
  %v755 = vld [vmem:[%s5 + $0xc] sm:$0xf]
  %v756 = vld [vmem:[%s6] sm:$0x1]
  %v758 = vlaneseq
  %v759 = vshrl.u32 %v758, 7
  %v760 = vsub.s32 0, %v759
  %v761 = vrot.slane %v756, %v760
  %764 = vrot.lane.b32.xlu0 %v751, 32
  %v765 = vpop.permute.xlu0 %764
  %v770 = vunpack.c.l.b16 %v752
  %v771 = vunpack.c.l.b16 %v753
  %v772 = vunpack.c.l.b16 %v754
  %v773 = vunpack.c.l.b16 %v755
  %v774 = vpack.c.b16 %v771, %v770
  %v775 = vpack.c.b16 %v773, %v772
  %v779 = vsel %vm178, %v765, 0
  %781 = vmatprep.subr.bf16.mxu0 0
  %782 = vmatpush1.bf16.msra.mxu0 %v774
  %783 = vmatprep.subr.bf16.mxu0 0
  %784 = vmatpush1.bf16.msra.mxu0 %v775
  %785 = vmatprep.subr.bf16.mxu0 0
  %786 = vmatpush1.bf16.msra.mxu0 0
  %787 = vmatprep.subr.bf16.mxu0 0
  %788 = vmatpush1.bf16.msra.mxu0 0
  %789 = vmatprep.subr.bf16.mxu0 0
  %790 = vmatpush1.bf16.msra.mxu0 0
  %791 = vmatprep.subr.bf16.mxu0 0
  %792 = vmatpush1.bf16.msra.mxu0 0
  %793 = vmatprep.subr.bf16.mxu0 0
  %794 = vmatpush1.bf16.msra.mxu0 0
  %795 = vmatprep.subr.bf16.mxu0 0
  %796 = vmatpush1.bf16.msra.mxu0 0
  %797 = vmatprep.subr.bf16.mxu0 0
  %798 = vmatpush1.bf16.msra.mxu0 0
  %799 = vmatprep.subr.bf16.mxu0 0
  %800 = vmatpush1.bf16.msra.mxu0 0
  %801 = vmatprep.subr.bf16.mxu0 0
  %802 = vmatpush1.bf16.msra.mxu0 0
  %803 = vmatprep.subr.bf16.mxu0 0
  %804 = vmatpush1.bf16.msra.mxu0 0
  %805 = vmatprep.subr.bf16.mxu0 0
  %806 = vmatpush1.bf16.msra.mxu0 0
  %807 = vmatprep.subr.bf16.mxu0 0
  %808 = vmatpush1.bf16.msra.mxu0 0
  %809 = vmatprep.subr.bf16.mxu0 0
  %810 = vmatpush1.bf16.msra.mxu0 0
  %811 = vmatprep.subr.bf16.mxu0 0
  %812 = vmatpush1.bf16.msra.mxu0 0
  %813 = vmatprep.mubr.bf16.mxu0 0
  %814 = vmatmul.mubr.bf16.gmra.mrb[0].mxu0 %v779
  %v815 = vpop.f32.mrb[0].mxu0
  %v816 = vadd.f32 %v761, %v815
  %v817 = vpop.f32.mrb[0].mxu0
  %v818 = vpop.f32.mrb[0].mxu0
  %v819 = vpop.f32.mrb[0].mxu0
  %820 = vdwg.mxu0
  %vm821 = vcmask 31744
  %822 = vst.msk [vmem:[%s13] sm:$0xff] %vm821, %v816
  %v823 = vld [vmem:[%s1] sm:$0xff]
  %v824 = vmul.f32 %v816, 0.5
  %v825 = vmul.f32 %v824, 1.442695
  %v826 = vpow.pop %v825
  %828 = vrot.lane.b32.xlu0 %v826, 126
  %v829 = vpop.permute.xlu0 %828
  %v831 = vmul.f32 %v823, %v829
  %v832 = vadd.f32 %v816, %v831
  %v833 = vld [vmem:[%s8] sm:$0xf]
  %v834 = vld [vmem:[%s8 + $0x4] sm:$0xf]
  %v835 = vld [vmem:[%s8 + $0x8] sm:$0xf]
  %v836 = vld [vmem:[%s8 + $0xc] sm:$0xf]
  %v837 = vpack.c.bf16 %v832, %v832
  %v838 = vld [vmem:[%s7] sm:$0x1]
  %v839 = vld [vmem:[%s9] sm:$0x1]
  %v841 = vlaneseq
  %v842 = vshrl.u32 %v841, 7
  %v843 = vsub.s32 0, %v842
  %v844 = vrot.slane %v839, %v843
  %v847 = vsel %vm84, %v837, 0
  %v850 = vsel %vm97, %v838, 0
  %852 = vmatprep.subr.bf16.mxu0 0
  %853 = vmatpush1.bf16.msra.mxu0 %v850
  %854 = vmatprep.subr.bf16.mxu0 0
  %855 = vmatpush1.bf16.msra.mxu0 0
  %856 = vmatprep.subr.bf16.mxu0 0
  %857 = vmatpush1.bf16.msra.mxu0 0
  %858 = vmatprep.subr.bf16.mxu0 0
  %859 = vmatpush1.bf16.msra.mxu0 0
  %860 = vmatprep.subr.bf16.mxu0 0
  %861 = vmatpush1.bf16.msra.mxu0 0
  %862 = vmatprep.subr.bf16.mxu0 0
  %863 = vmatpush1.bf16.msra.mxu0 0
  %864 = vmatprep.subr.bf16.mxu0 0
  %865 = vmatpush1.bf16.msra.mxu0 0
  %866 = vmatprep.subr.bf16.mxu0 0
  %867 = vmatpush1.bf16.msra.mxu0 0
  %868 = vmatprep.subr.bf16.mxu0 0
  %869 = vmatpush1.bf16.msra.mxu0 0
  %870 = vmatprep.subr.bf16.mxu0 0
  %871 = vmatpush1.bf16.msra.mxu0 0
  %872 = vmatprep.subr.bf16.mxu0 0
  %873 = vmatpush1.bf16.msra.mxu0 0
  %874 = vmatprep.subr.bf16.mxu0 0
  %875 = vmatpush1.bf16.msra.mxu0 0
  %876 = vmatprep.subr.bf16.mxu0 0
  %877 = vmatpush1.bf16.msra.mxu0 0
  %878 = vmatprep.subr.bf16.mxu0 0
  %879 = vmatpush1.bf16.msra.mxu0 0
  %880 = vmatprep.subr.bf16.mxu0 0
  %881 = vmatpush1.bf16.msra.mxu0 0
  %882 = vmatprep.subr.bf16.mxu0 0
  %883 = vmatpush1.bf16.msra.mxu0 0
  %884 = vmatprep.mubr.bf16.mxu0 0
  %885 = vmatmul.mubr.bf16.gmra.mrb[0].mxu0 %v847
  %v886 = vpop.f32.mrb[0].mxu0
  %v887 = vadd.f32 %v844, %v886
  %v888 = vpop.f32.mrb[0].mxu0
  %v889 = vpop.f32.mrb[0].mxu0
  %v890 = vpop.f32.mrb[0].mxu0
  %891 = vdwg.mxu0
  %v896 = vunpack.c.l.b16 %v833
  %v897 = vunpack.c.l.b16 %v834
  %v898 = vunpack.c.l.b16 %v835
  %v899 = vunpack.c.l.b16 %v836
  %v900 = vpack.c.b16 %v897, %v896
  %v901 = vpack.c.b16 %v899, %v898
  %904 = vmatprep.subr.bf16.mxu0 0
  %905 = vmatpush1.bf16.msra.mxu0 %v900
  %906 = vmatprep.subr.bf16.mxu0 0
  %907 = vmatpush1.bf16.msra.mxu0 %v901
  %908 = vmatprep.subr.bf16.mxu0 0
  %909 = vmatpush1.bf16.msra.mxu0 0
  %910 = vmatprep.subr.bf16.mxu0 0
  %911 = vmatpush1.bf16.msra.mxu0 0
  %912 = vmatprep.subr.bf16.mxu0 0
  %913 = vmatpush1.bf16.msra.mxu0 0
  %914 = vmatprep.subr.bf16.mxu0 0
  %915 = vmatpush1.bf16.msra.mxu0 0
  %916 = vmatprep.subr.bf16.mxu0 0
  %917 = vmatpush1.bf16.msra.mxu0 0
  %918 = vmatprep.subr.bf16.mxu0 0
  %919 = vmatpush1.bf16.msra.mxu0 0
  %920 = vmatprep.subr.bf16.mxu0 0
  %921 = vmatpush1.bf16.msra.mxu0 0
  %922 = vmatprep.subr.bf16.mxu0 0
  %923 = vmatpush1.bf16.msra.mxu0 0
  %924 = vmatprep.subr.bf16.mxu0 0
  %925 = vmatpush1.bf16.msra.mxu0 0
  %926 = vmatprep.subr.bf16.mxu0 0
  %927 = vmatpush1.bf16.msra.mxu0 0
  %928 = vmatprep.subr.bf16.mxu0 0
  %929 = vmatpush1.bf16.msra.mxu0 0
  %930 = vmatprep.subr.bf16.mxu0 0
  %931 = vmatpush1.bf16.msra.mxu0 0
  %932 = vmatprep.subr.bf16.mxu0 0
  %933 = vmatpush1.bf16.msra.mxu0 0
  %934 = vmatprep.subr.bf16.mxu0 0
  %935 = vmatpush1.bf16.msra.mxu0 0
  %936 = vmatprep.mubr.bf16.mxu0 0
  %937 = vmatmul.mubr.bf16.gmra.mrb[0].mxu0 %v180
  %v938 = vpop.f32.mrb[0].mxu0
  %v939 = vadd.f32 0.0, %v938
  %v940 = vpop.f32.mrb[0].mxu0
  %v941 = vpop.f32.mrb[0].mxu0
  %v942 = vpop.f32.mrb[0].mxu0
  %943 = vdwg.mxu0
  %v944 = vadd.f32 %v887, %v939
  %v945 = vxor.u32 %v944, 2147483648
  %v946 = vmul.f32 %v945, 1.442695
  %v947 = vpow.pop %v946
  %v948 = vadd.f32 %v947, 1.0
  %v949 = vrcp.pop %v948
  %v950 = vmul.f32 1.0, %v949
  %v951 = vtanh.pop %v944
  %v952 = vmul.f32 %v950, 0.0
  %954 = vrot.lane.b32.xlu0 %v951, 64
  %v955 = vpop.permute.xlu0 %954
  %v957 = vmul.f32 %v950, %v955
  %959 = vrot.lane.b32.xlu0 %v957, 32
  %v960 = vpop.permute.xlu0 %959
  %v962 = vadd.f32 %v952, %v960
  %v963 = vtanh.pop %v962
  %965 = vrot.lane.b32.xlu0 %v963, 64
  %v966 = vpop.permute.xlu0 %965
  %v968 = vmul.f32 %v950, %v966
  %v969 = vpack.c.bf16 %v968, %v968
  %971 = vrot.lane.b32.xlu0 %v969, 32
  %v972 = vpop.permute.xlu0 %971
  %v974 = vsel %vm178, %v972, 0
  %976 = vmatprep.subr.bf16.mxu0 0
  %977 = vmatpush1.bf16.msra.mxu0 %v900
  %978 = vmatprep.subr.bf16.mxu0 0
  %979 = vmatpush1.bf16.msra.mxu0 %v901
  %980 = vmatprep.subr.bf16.mxu0 0
  %981 = vmatpush1.bf16.msra.mxu0 0
  %982 = vmatprep.subr.bf16.mxu0 0
  %983 = vmatpush1.bf16.msra.mxu0 0
  %984 = vmatprep.subr.bf16.mxu0 0
  %985 = vmatpush1.bf16.msra.mxu0 0
  %986 = vmatprep.subr.bf16.mxu0 0
  %987 = vmatpush1.bf16.msra.mxu0 0
  %988 = vmatprep.subr.bf16.mxu0 0
  %989 = vmatpush1.bf16.msra.mxu0 0
  %990 = vmatprep.subr.bf16.mxu0 0
  %991 = vmatpush1.bf16.msra.mxu0 0
  %992 = vmatprep.subr.bf16.mxu0 0
  %993 = vmatpush1.bf16.msra.mxu0 0
  %994 = vmatprep.subr.bf16.mxu0 0
  %995 = vmatpush1.bf16.msra.mxu0 0
  %996 = vmatprep.subr.bf16.mxu0 0
  %997 = vmatpush1.bf16.msra.mxu0 0
  %998 = vmatprep.subr.bf16.mxu0 0
  %999 = vmatpush1.bf16.msra.mxu0 0
  %1000 = vmatprep.subr.bf16.mxu0 0
  %1001 = vmatpush1.bf16.msra.mxu0 0
  %1002 = vmatprep.subr.bf16.mxu0 0
  %1003 = vmatpush1.bf16.msra.mxu0 0
  %1004 = vmatprep.subr.bf16.mxu0 0
  %1005 = vmatpush1.bf16.msra.mxu0 0
  %1006 = vmatprep.subr.bf16.mxu0 0
  %1007 = vmatpush1.bf16.msra.mxu0 0
  %1008 = vmatprep.mubr.bf16.mxu0 0
  %1009 = vmatmul.mubr.bf16.gmra.mrb[0].mxu0 %v974
  %v1010 = vpop.f32.mrb[0].mxu0
  %v1011 = vadd.f32 0.0, %v1010
  %v1012 = vpop.f32.mrb[0].mxu0
  %v1013 = vpop.f32.mrb[0].mxu0
  %v1014 = vpop.f32.mrb[0].mxu0
  %1015 = vdwg.mxu0
  %v1016 = vadd.f32 %v887, %v1011
  %v1017 = vxor.u32 %v1016, 2147483648
  %v1018 = vmul.f32 %v1017, 1.442695
  %v1019 = vpow.pop %v1018
  %v1020 = vadd.f32 %v1019, 1.0
  %v1021 = vrcp.pop %v1020
  %v1022 = vmul.f32 1.0, %v1021
  %v1023 = vtanh.pop %v1016
  %v1024 = vmul.f32 %v1022, %v962
  %1026 = vrot.lane.b32.xlu0 %v1023, 64
  %v1027 = vpop.permute.xlu0 %1026
  %v1029 = vmul.f32 %v1022, %v1027
  %1031 = vrot.lane.b32.xlu0 %v1029, 32
  %v1032 = vpop.permute.xlu0 %1031
  %v1034 = vadd.f32 %v1024, %v1032
  %v1035 = vtanh.pop %v1034
  %1037 = vrot.lane.b32.xlu0 %v1035, 64
  %v1038 = vpop.permute.xlu0 %1037
  %v1040 = vmul.f32 %v1022, %v1038
  %v1041 = vpack.c.bf16 %v1040, %v1040
  %1043 = vrot.lane.b32.xlu0 %v1041, 32
  %v1044 = vpop.permute.xlu0 %1043
  %v1046 = vsel %vm178, %v1044, 0
  %1048 = vmatprep.subr.bf16.mxu0 0
  %1049 = vmatpush1.bf16.msra.mxu0 %v900
  %1050 = vmatprep.subr.bf16.mxu0 0
  %1051 = vmatpush1.bf16.msra.mxu0 %v901
  %1052 = vmatprep.subr.bf16.mxu0 0
  %1053 = vmatpush1.bf16.msra.mxu0 0
  %1054 = vmatprep.subr.bf16.mxu0 0
  %1055 = vmatpush1.bf16.msra.mxu0 0
  %1056 = vmatprep.subr.bf16.mxu0 0
  %1057 = vmatpush1.bf16.msra.mxu0 0
  %1058 = vmatprep.subr.bf16.mxu0 0
  %1059 = vmatpush1.bf16.msra.mxu0 0
  %1060 = vmatprep.subr.bf16.mxu0 0
  %1061 = vmatpush1.bf16.msra.mxu0 0
  %1062 = vmatprep.subr.bf16.mxu0 0
  %1063 = vmatpush1.bf16.msra.mxu0 0
  %1064 = vmatprep.subr.bf16.mxu0 0
  %1065 = vmatpush1.bf16.msra.mxu0 0
  %1066 = vmatprep.subr.bf16.mxu0 0
  %1067 = vmatpush1.bf16.msra.mxu0 0
  %1068 = vmatprep.subr.bf16.mxu0 0
  %1069 = vmatpush1.bf16.msra.mxu0 0
  %1070 = vmatprep.subr.bf16.mxu0 0
  %1071 = vmatpush1.bf16.msra.mxu0 0
  %1072 = vmatprep.subr.bf16.mxu0 0
  %1073 = vmatpush1.bf16.msra.mxu0 0
  %1074 = vmatprep.subr.bf16.mxu0 0
  %1075 = vmatpush1.bf16.msra.mxu0 0
  %1076 = vmatprep.subr.bf16.mxu0 0
  %1077 = vmatpush1.bf16.msra.mxu0 0
  %1078 = vmatprep.subr.bf16.mxu0 0
  %1079 = vmatpush1.bf16.msra.mxu0 0
  %1080 = vmatprep.mubr.bf16.mxu0 0
  %1081 = vmatmul.mubr.bf16.gmra.mrb[0].mxu0 %v1046
  %v1082 = vpop.f32.mrb[0].mxu0
  %v1083 = vadd.f32 0.0, %v1082
  %v1084 = vpop.f32.mrb[0].mxu0
  %v1085 = vpop.f32.mrb[0].mxu0
  %v1086 = vpop.f32.mrb[0].mxu0
  %1087 = vdwg.mxu0
  %v1088 = vadd.f32 %v887, %v1083
  %v1089 = vxor.u32 %v1088, 2147483648
  %v1090 = vmul.f32 %v1089, 1.442695
  %v1091 = vpow.pop %v1090
  %v1092 = vadd.f32 %v1091, 1.0
  %v1093 = vrcp.pop %v1092
  %v1094 = vmul.f32 1.0, %v1093
  %v1095 = vtanh.pop %v1088
  %v1096 = vmul.f32 %v1094, %v1034
  %1098 = vrot.lane.b32.xlu0 %v1095, 64
  %v1099 = vpop.permute.xlu0 %1098
  %v1101 = vmul.f32 %v1094, %v1099
  %1103 = vrot.lane.b32.xlu0 %v1101, 32
  %v1104 = vpop.permute.xlu0 %1103
  %v1106 = vadd.f32 %v1096, %v1104
  %v1107 = vtanh.pop %v1106
  %1109 = vrot.lane.b32.xlu0 %v1107, 64
  %v1110 = vpop.permute.xlu0 %1109
  %v1112 = vmul.f32 %v1094, %v1110
  %v1113 = vpack.c.bf16 %v1112, %v1112
  %1115 = vrot.lane.b32.xlu0 %v1113, 32
  %v1116 = vpop.permute.xlu0 %1115
  %v1118 = vsel %vm178, %v1116, 0
  %1120 = vmatprep.subr.bf16.mxu0 0
  %1121 = vmatpush1.bf16.msra.mxu0 %v900
  %1122 = vmatprep.subr.bf16.mxu0 0
  %1123 = vmatpush1.bf16.msra.mxu0 %v901
  %1124 = vmatprep.subr.bf16.mxu0 0
  %1125 = vmatpush1.bf16.msra.mxu0 0
  %1126 = vmatprep.subr.bf16.mxu0 0
  %1127 = vmatpush1.bf16.msra.mxu0 0
  %1128 = vmatprep.subr.bf16.mxu0 0
  %1129 = vmatpush1.bf16.msra.mxu0 0
  %1130 = vmatprep.subr.bf16.mxu0 0
  %1131 = vmatpush1.bf16.msra.mxu0 0
  %1132 = vmatprep.subr.bf16.mxu0 0
  %1133 = vmatpush1.bf16.msra.mxu0 0
  %1134 = vmatprep.subr.bf16.mxu0 0
  %1135 = vmatpush1.bf16.msra.mxu0 0
  %1136 = vmatprep.subr.bf16.mxu0 0
  %1137 = vmatpush1.bf16.msra.mxu0 0
  %1138 = vmatprep.subr.bf16.mxu0 0
  %1139 = vmatpush1.bf16.msra.mxu0 0
  %1140 = vmatprep.subr.bf16.mxu0 0
  %1141 = vmatpush1.bf16.msra.mxu0 0
  %1142 = vmatprep.subr.bf16.mxu0 0
  %1143 = vmatpush1.bf16.msra.mxu0 0
  %1144 = vmatprep.subr.bf16.mxu0 0
  %1145 = vmatpush1.bf16.msra.mxu0 0
  %1146 = vmatprep.subr.bf16.mxu0 0
  %1147 = vmatpush1.bf16.msra.mxu0 0
  %1148 = vmatprep.subr.bf16.mxu0 0
  %1149 = vmatpush1.bf16.msra.mxu0 0
  %1150 = vmatprep.subr.bf16.mxu0 0
  %1151 = vmatpush1.bf16.msra.mxu0 0
  %1152 = vmatprep.mubr.bf16.mxu0 0
  %1153 = vmatmul.mubr.bf16.gmra.mrb[0].mxu0 %v1118
  %v1154 = vpop.f32.mrb[0].mxu0
  %v1155 = vadd.f32 0.0, %v1154
  %v1156 = vpop.f32.mrb[0].mxu0
  %v1157 = vpop.f32.mrb[0].mxu0
  %v1158 = vpop.f32.mrb[0].mxu0
  %1159 = vdwg.mxu0
  %v1160 = vadd.f32 %v887, %v1155
  %v1161 = vxor.u32 %v1160, 2147483648
  %v1162 = vmul.f32 %v1161, 1.442695
  %v1163 = vpow.pop %v1162
  %v1164 = vadd.f32 %v1163, 1.0
  %v1165 = vrcp.pop %v1164
  %v1166 = vmul.f32 1.0, %v1165
  %v1167 = vtanh.pop %v1160
  %v1168 = vmul.f32 %v1166, %v1106
  %1170 = vrot.lane.b32.xlu0 %v1167, 64
  %v1171 = vpop.permute.xlu0 %1170
  %v1173 = vmul.f32 %v1166, %v1171
  %1175 = vrot.lane.b32.xlu0 %v1173, 32
  %v1176 = vpop.permute.xlu0 %1175
  %v1178 = vadd.f32 %v1168, %v1176
  %v1179 = vtanh.pop %v1178
  %1181 = vrot.lane.b32.xlu0 %v1179, 64
  %v1182 = vpop.permute.xlu0 %1181
  %v1184 = vmul.f32 %v1166, %v1182
  %v1185 = vpack.c.bf16 %v1184, %v1184
  %1187 = vrot.lane.b32.xlu0 %v1185, 32
  %v1188 = vpop.permute.xlu0 %1187
  %v1190 = vsel %vm178, %v1188, 0
  %1192 = vmatprep.subr.bf16.mxu0 0
  %1193 = vmatpush1.bf16.msra.mxu0 %v900
  %1194 = vmatprep.subr.bf16.mxu0 0
  %1195 = vmatpush1.bf16.msra.mxu0 %v901
  %1196 = vmatprep.subr.bf16.mxu0 0
  %1197 = vmatpush1.bf16.msra.mxu0 0
  %1198 = vmatprep.subr.bf16.mxu0 0
  %1199 = vmatpush1.bf16.msra.mxu0 0
  %1200 = vmatprep.subr.bf16.mxu0 0
  %1201 = vmatpush1.bf16.msra.mxu0 0
  %1202 = vmatprep.subr.bf16.mxu0 0
  %1203 = vmatpush1.bf16.msra.mxu0 0
  %1204 = vmatprep.subr.bf16.mxu0 0
  %1205 = vmatpush1.bf16.msra.mxu0 0
  %1206 = vmatprep.subr.bf16.mxu0 0
  %1207 = vmatpush1.bf16.msra.mxu0 0
  %1208 = vmatprep.subr.bf16.mxu0 0
  %1209 = vmatpush1.bf16.msra.mxu0 0
  %1210 = vmatprep.subr.bf16.mxu0 0
  %1211 = vmatpush1.bf16.msra.mxu0 0
  %1212 = vmatprep.subr.bf16.mxu0 0
  %1213 = vmatpush1.bf16.msra.mxu0 0
  %1214 = vmatprep.subr.bf16.mxu0 0
  %1215 = vmatpush1.bf16.msra.mxu0 0
  %1216 = vmatprep.subr.bf16.mxu0 0
  %1217 = vmatpush1.bf16.msra.mxu0 0
  %1218 = vmatprep.subr.bf16.mxu0 0
  %1219 = vmatpush1.bf16.msra.mxu0 0
  %1220 = vmatprep.subr.bf16.mxu0 0
  %1221 = vmatpush1.bf16.msra.mxu0 0
  %1222 = vmatprep.subr.bf16.mxu0 0
  %1223 = vmatpush1.bf16.msra.mxu0 0
  %1224 = vmatprep.mubr.bf16.mxu0 0
  %1225 = vmatmul.mubr.bf16.gmra.mrb[0].mxu0 %v1190
  %v1226 = vpop.f32.mrb[0].mxu0
  %v1227 = vadd.f32 0.0, %v1226
  %v1228 = vpop.f32.mrb[0].mxu0
  %v1229 = vpop.f32.mrb[0].mxu0
  %v1230 = vpop.f32.mrb[0].mxu0
  %1231 = vdwg.mxu0
  %v1232 = vadd.f32 %v887, %v1227
  %v1233 = vxor.u32 %v1232, 2147483648
  %v1234 = vmul.f32 %v1233, 1.442695
  %v1235 = vpow.pop %v1234
  %v1236 = vadd.f32 %v1235, 1.0
  %v1237 = vrcp.pop %v1236
  %v1238 = vmul.f32 1.0, %v1237
  %v1239 = vtanh.pop %v1232
  %v1240 = vmul.f32 %v1238, %v1178
  %1242 = vrot.lane.b32.xlu0 %v1239, 64
  %v1243 = vpop.permute.xlu0 %1242
  %v1245 = vmul.f32 %v1238, %v1243
  %1247 = vrot.lane.b32.xlu0 %v1245, 32
  %v1248 = vpop.permute.xlu0 %1247
  %v1250 = vadd.f32 %v1240, %v1248
  %v1251 = vtanh.pop %v1250
  %1253 = vrot.lane.b32.xlu0 %v1251, 64
  %v1254 = vpop.permute.xlu0 %1253
  %v1256 = vmul.f32 %v1238, %v1254
  %v1257 = vpack.c.bf16 %v1256, %v1256
  %1259 = vrot.lane.b32.xlu0 %v1257, 32
  %v1260 = vpop.permute.xlu0 %1259
  %v1262 = vsel %vm178, %v1260, 0
  %1264 = vmatprep.subr.bf16.mxu0 0
  %1265 = vmatpush1.bf16.msra.mxu0 %v900
  %1266 = vmatprep.subr.bf16.mxu0 0
  %1267 = vmatpush1.bf16.msra.mxu0 %v901
  %1268 = vmatprep.subr.bf16.mxu0 0
  %1269 = vmatpush1.bf16.msra.mxu0 0
  %1270 = vmatprep.subr.bf16.mxu0 0
  %1271 = vmatpush1.bf16.msra.mxu0 0
  %1272 = vmatprep.subr.bf16.mxu0 0
  %1273 = vmatpush1.bf16.msra.mxu0 0
  %1274 = vmatprep.subr.bf16.mxu0 0
  %1275 = vmatpush1.bf16.msra.mxu0 0
  %1276 = vmatprep.subr.bf16.mxu0 0
  %1277 = vmatpush1.bf16.msra.mxu0 0
  %1278 = vmatprep.subr.bf16.mxu0 0
  %1279 = vmatpush1.bf16.msra.mxu0 0
  %1280 = vmatprep.subr.bf16.mxu0 0
  %1281 = vmatpush1.bf16.msra.mxu0 0
  %1282 = vmatprep.subr.bf16.mxu0 0
  %1283 = vmatpush1.bf16.msra.mxu0 0
  %1284 = vmatprep.subr.bf16.mxu0 0
  %1285 = vmatpush1.bf16.msra.mxu0 0
  %1286 = vmatprep.subr.bf16.mxu0 0
  %1287 = vmatpush1.bf16.msra.mxu0 0
  %1288 = vmatprep.subr.bf16.mxu0 0
  %1289 = vmatpush1.bf16.msra.mxu0 0
  %1290 = vmatprep.subr.bf16.mxu0 0
  %1291 = vmatpush1.bf16.msra.mxu0 0
  %1292 = vmatprep.subr.bf16.mxu0 0
  %1293 = vmatpush1.bf16.msra.mxu0 0
  %1294 = vmatprep.subr.bf16.mxu0 0
  %1295 = vmatpush1.bf16.msra.mxu0 0
  %1296 = vmatprep.mubr.bf16.mxu0 0
  %1297 = vmatmul.mubr.bf16.gmra.mrb[0].mxu0 %v1262
  %v1298 = vpop.f32.mrb[0].mxu0
  %v1299 = vadd.f32 0.0, %v1298
  %v1300 = vpop.f32.mrb[0].mxu0
  %v1301 = vpop.f32.mrb[0].mxu0
  %v1302 = vpop.f32.mrb[0].mxu0
  %1303 = vdwg.mxu0
  %v1304 = vadd.f32 %v887, %v1299
  %v1305 = vxor.u32 %v1304, 2147483648
  %v1306 = vmul.f32 %v1305, 1.442695
  %v1307 = vpow.pop %v1306
  %v1308 = vadd.f32 %v1307, 1.0
  %v1309 = vrcp.pop %v1308
  %v1310 = vmul.f32 1.0, %v1309
  %v1311 = vtanh.pop %v1304
  %v1312 = vmul.f32 %v1310, %v1250
  %1314 = vrot.lane.b32.xlu0 %v1311, 64
  %v1315 = vpop.permute.xlu0 %1314
  %v1317 = vmul.f32 %v1310, %v1315
  %1319 = vrot.lane.b32.xlu0 %v1317, 32
  %v1320 = vpop.permute.xlu0 %1319
  %v1322 = vadd.f32 %v1312, %v1320
  %v1323 = vtanh.pop %v1322
  %1325 = vrot.lane.b32.xlu0 %v1323, 64
  %v1326 = vpop.permute.xlu0 %1325
  %v1328 = vmul.f32 %v1310, %v1326
  %v1329 = vpack.c.bf16 %v1328, %v1328
  %1331 = vrot.lane.b32.xlu0 %v1329, 32
  %v1332 = vpop.permute.xlu0 %1331
  %v1334 = vsel %vm178, %v1332, 0
  %1336 = vmatprep.subr.bf16.mxu0 0
  %1337 = vmatpush1.bf16.msra.mxu0 %v900
  %1338 = vmatprep.subr.bf16.mxu0 0
  %1339 = vmatpush1.bf16.msra.mxu0 %v901
  %1340 = vmatprep.subr.bf16.mxu0 0
  %1341 = vmatpush1.bf16.msra.mxu0 0
  %1342 = vmatprep.subr.bf16.mxu0 0
  %1343 = vmatpush1.bf16.msra.mxu0 0
  %1344 = vmatprep.subr.bf16.mxu0 0
  %1345 = vmatpush1.bf16.msra.mxu0 0
  %1346 = vmatprep.subr.bf16.mxu0 0
  %1347 = vmatpush1.bf16.msra.mxu0 0
  %1348 = vmatprep.subr.bf16.mxu0 0
  %1349 = vmatpush1.bf16.msra.mxu0 0
  %1350 = vmatprep.subr.bf16.mxu0 0
  %1351 = vmatpush1.bf16.msra.mxu0 0
  %1352 = vmatprep.subr.bf16.mxu0 0
  %1353 = vmatpush1.bf16.msra.mxu0 0
  %1354 = vmatprep.subr.bf16.mxu0 0
  %1355 = vmatpush1.bf16.msra.mxu0 0
  %1356 = vmatprep.subr.bf16.mxu0 0
  %1357 = vmatpush1.bf16.msra.mxu0 0
  %1358 = vmatprep.subr.bf16.mxu0 0
  %1359 = vmatpush1.bf16.msra.mxu0 0
  %1360 = vmatprep.subr.bf16.mxu0 0
  %1361 = vmatpush1.bf16.msra.mxu0 0
  %1362 = vmatprep.subr.bf16.mxu0 0
  %1363 = vmatpush1.bf16.msra.mxu0 0
  %1364 = vmatprep.subr.bf16.mxu0 0
  %1365 = vmatpush1.bf16.msra.mxu0 0
  %1366 = vmatprep.subr.bf16.mxu0 0
  %1367 = vmatpush1.bf16.msra.mxu0 0
  %1368 = vmatprep.mubr.bf16.mxu0 0
  %1369 = vmatmul.mubr.bf16.gmra.mrb[0].mxu0 %v1334
  %v1370 = vpop.f32.mrb[0].mxu0
  %v1371 = vadd.f32 0.0, %v1370
  %v1372 = vpop.f32.mrb[0].mxu0
  %v1373 = vpop.f32.mrb[0].mxu0
  %v1374 = vpop.f32.mrb[0].mxu0
  %1375 = vdwg.mxu0
  %v1376 = vadd.f32 %v887, %v1371
  %v1377 = vxor.u32 %v1376, 2147483648
  %v1378 = vmul.f32 %v1377, 1.442695
  %v1379 = vpow.pop %v1378
  %v1380 = vadd.f32 %v1379, 1.0
  %v1381 = vrcp.pop %v1380
  %v1382 = vmul.f32 1.0, %v1381
  %v1383 = vtanh.pop %v1376
  %v1384 = vmul.f32 %v1382, %v1322
  %1386 = vrot.lane.b32.xlu0 %v1383, 64
  %v1387 = vpop.permute.xlu0 %1386
  %v1389 = vmul.f32 %v1382, %v1387
  %1391 = vrot.lane.b32.xlu0 %v1389, 32
  %v1392 = vpop.permute.xlu0 %1391
  %v1394 = vadd.f32 %v1384, %v1392
  %v1395 = vtanh.pop %v1394
  %1397 = vrot.lane.b32.xlu0 %v1395, 64
  %v1398 = vpop.permute.xlu0 %1397
  %v1400 = vmul.f32 %v1382, %v1398
  %v1401 = vpack.c.bf16 %v1400, %v1400
  %1403 = vrot.lane.b32.xlu0 %v1401, 32
  %v1404 = vpop.permute.xlu0 %1403
  %v1406 = vsel %vm178, %v1404, 0
  %1408 = vmatprep.subr.bf16.mxu0 0
  %1409 = vmatpush1.bf16.msra.mxu0 %v900
  %1410 = vmatprep.subr.bf16.mxu0 0
  %1411 = vmatpush1.bf16.msra.mxu0 %v901
  %1412 = vmatprep.subr.bf16.mxu0 0
  %1413 = vmatpush1.bf16.msra.mxu0 0
  %1414 = vmatprep.subr.bf16.mxu0 0
  %1415 = vmatpush1.bf16.msra.mxu0 0
  %1416 = vmatprep.subr.bf16.mxu0 0
  %1417 = vmatpush1.bf16.msra.mxu0 0
  %1418 = vmatprep.subr.bf16.mxu0 0
  %1419 = vmatpush1.bf16.msra.mxu0 0
  %1420 = vmatprep.subr.bf16.mxu0 0
  %1421 = vmatpush1.bf16.msra.mxu0 0
  %1422 = vmatprep.subr.bf16.mxu0 0
  %1423 = vmatpush1.bf16.msra.mxu0 0
  %1424 = vmatprep.subr.bf16.mxu0 0
  %1425 = vmatpush1.bf16.msra.mxu0 0
  %1426 = vmatprep.subr.bf16.mxu0 0
  %1427 = vmatpush1.bf16.msra.mxu0 0
  %1428 = vmatprep.subr.bf16.mxu0 0
  %1429 = vmatpush1.bf16.msra.mxu0 0
  %1430 = vmatprep.subr.bf16.mxu0 0
  %1431 = vmatpush1.bf16.msra.mxu0 0
  %1432 = vmatprep.subr.bf16.mxu0 0
  %1433 = vmatpush1.bf16.msra.mxu0 0
  %1434 = vmatprep.subr.bf16.mxu0 0
  %1435 = vmatpush1.bf16.msra.mxu0 0
  %1436 = vmatprep.subr.bf16.mxu0 0
  %1437 = vmatpush1.bf16.msra.mxu0 0
  %1438 = vmatprep.subr.bf16.mxu0 0
  %1439 = vmatpush1.bf16.msra.mxu0 0
  %1440 = vmatprep.mubr.bf16.mxu0 0
  %1441 = vmatmul.mubr.bf16.gmra.mrb[0].mxu0 %v1406
  %v1442 = vpop.f32.mrb[0].mxu0
  %v1443 = vadd.f32 0.0, %v1442
  %v1444 = vpop.f32.mrb[0].mxu0
  %v1445 = vpop.f32.mrb[0].mxu0
  %v1446 = vpop.f32.mrb[0].mxu0
  %1447 = vdwg.mxu0
  %v1448 = vadd.f32 %v887, %v1443
  %v1449 = vxor.u32 %v1448, 2147483648
  %v1450 = vmul.f32 %v1449, 1.442695
  %v1451 = vpow.pop %v1450
  %v1452 = vadd.f32 %v1451, 1.0
  %v1453 = vrcp.pop %v1452
  %v1454 = vmul.f32 1.0, %v1453
  %v1455 = vtanh.pop %v1448
  %v1456 = vmul.f32 %v1454, %v1394
  %1458 = vrot.lane.b32.xlu0 %v1455, 64
  %v1459 = vpop.permute.xlu0 %1458
  %v1461 = vmul.f32 %v1454, %v1459
  %1463 = vrot.lane.b32.xlu0 %v1461, 32
  %v1464 = vpop.permute.xlu0 %1463
  %v1466 = vadd.f32 %v1456, %v1464
  %v1467 = vtanh.pop %v1466
  %1469 = vrot.lane.b32.xlu0 %v1467, 64
  %v1470 = vpop.permute.xlu0 %1469
  %v1472 = vmul.f32 %v1454, %v1470
  %v1473 = vpack.c.bf16 %v1040, %v968
  %v1474 = vpack.c.bf16 %v1184, %v1112
  %v1475 = vpack.c.bf16 %v1328, %v1256
  %v1476 = vpack.c.bf16 %v1472, %v1400
  %v1477 = vld [vmem:[%s10] sm:$0xf]
  %v1478 = vld [vmem:[%s10 + $0x4] sm:$0xf]
  %v1479 = vld [vmem:[%s10 + $0x8] sm:$0xf]
  %v1480 = vld [vmem:[%s10 + $0xc] sm:$0xf]
  %v1481 = vld [vmem:[%s11] sm:$0x1]
  %v1483 = vlaneseq
  %v1484 = vshrl.u32 %v1483, 7
  %v1485 = vsub.s32 0, %v1484
  %v1486 = vrot.slane %v1481, %v1485
  %1492 = vrot.lane.b32.xlu0 %v1473, 32
  %v1493 = vpop.permute.xlu0 %1492
  %1494 = vrot.lane.b32.xlu0 %v1474, 32
  %v1495 = vpop.permute.xlu0 %1494
  %1496 = vrot.lane.b32.xlu0 %v1475, 32
  %v1497 = vpop.permute.xlu0 %1496
  %1498 = vrot.lane.b32.xlu0 %v1476, 32
  %v1499 = vpop.permute.xlu0 %1498
  %v1504 = vunpack.c.l.b16 %v1477
  %v1505 = vunpack.c.l.b16 %v1478
  %v1506 = vunpack.c.l.b16 %v1479
  %v1507 = vunpack.c.l.b16 %v1480
  %v1508 = vpack.c.b16 %v1505, %v1504
  %v1509 = vpack.c.b16 %v1507, %v1506
  %v1513 = vsel %vm178, %v1493, 0
  %v1516 = vsel %vm178, %v1495, 0
  %v1519 = vsel %vm178, %v1497, 0
  %v1522 = vsel %vm178, %v1499, 0
  %1524 = vmatprep.subr.bf16.mxu0 0
  %1525 = vmatpush1.bf16.msra.mxu0 %v1508
  %1526 = vmatprep.subr.bf16.mxu0 0
  %1527 = vmatpush1.bf16.msra.mxu0 %v1509
  %1528 = vmatprep.subr.bf16.mxu0 0
  %1529 = vmatpush1.bf16.msra.mxu0 0
  %1530 = vmatprep.subr.bf16.mxu0 0
  %1531 = vmatpush1.bf16.msra.mxu0 0
  %1532 = vmatprep.subr.bf16.mxu0 0
  %1533 = vmatpush1.bf16.msra.mxu0 0
  %1534 = vmatprep.subr.bf16.mxu0 0
  %1535 = vmatpush1.bf16.msra.mxu0 0
  %1536 = vmatprep.subr.bf16.mxu0 0
  %1537 = vmatpush1.bf16.msra.mxu0 0
  %1538 = vmatprep.subr.bf16.mxu0 0
  %1539 = vmatpush1.bf16.msra.mxu0 0
  %1540 = vmatprep.subr.bf16.mxu0 0
  %1541 = vmatpush1.bf16.msra.mxu0 0
  %1542 = vmatprep.subr.bf16.mxu0 0
  %1543 = vmatpush1.bf16.msra.mxu0 0
  %1544 = vmatprep.subr.bf16.mxu0 0
  %1545 = vmatpush1.bf16.msra.mxu0 0
  %1546 = vmatprep.subr.bf16.mxu0 0
  %1547 = vmatpush1.bf16.msra.mxu0 0
  %1548 = vmatprep.subr.bf16.mxu0 0
  %1549 = vmatpush1.bf16.msra.mxu0 0
  %1550 = vmatprep.subr.bf16.mxu0 0
  %1551 = vmatpush1.bf16.msra.mxu0 0
  %1552 = vmatprep.subr.bf16.mxu0 0
  %1553 = vmatpush1.bf16.msra.mxu0 0
  %1554 = vmatprep.subr.bf16.mxu0 0
  %1555 = vmatpush1.bf16.msra.mxu0 0
  %1556 = vmatprep.mubr.bf16.mxu0 0
  %1557 = vmatmul.mubr.bf16.gmra.mrb[0].mxu0 %v1513
  %v1558 = vpop.f32.mrb[0].mxu0
  %v1559 = vadd.f32 %v1486, %v1558
  %v1560 = vpop.f32.mrb[0].mxu0
  %v1561 = vpop.f32.mrb[0].mxu0
  %v1562 = vadd.f32 %v1486, %v1561
  %v1563 = vpop.f32.mrb[0].mxu0
  %1564 = vmatprep.mubr.bf16.mxu0 0
  %1565 = vmatmul.mubr.bf16.gmra.mrb[0].mxu0 %v1516
  %v1566 = vpop.f32.mrb[0].mxu0
  %v1567 = vadd.f32 %v1486, %v1566
  %v1568 = vpop.f32.mrb[0].mxu0
  %v1569 = vpop.f32.mrb[0].mxu0
  %v1570 = vadd.f32 %v1486, %v1569
  %v1571 = vpop.f32.mrb[0].mxu0
  %1572 = vmatprep.mubr.bf16.mxu0 0
  %1573 = vmatmul.mubr.bf16.gmra.mrb[0].mxu0 %v1519
  %v1574 = vpop.f32.mrb[0].mxu0
  %v1575 = vadd.f32 %v1486, %v1574
  %v1576 = vpop.f32.mrb[0].mxu0
  %v1577 = vpop.f32.mrb[0].mxu0
  %v1578 = vadd.f32 %v1486, %v1577
  %v1579 = vpop.f32.mrb[0].mxu0
  %1580 = vmatprep.mubr.bf16.mxu0 0
  %1581 = vmatmul.mubr.bf16.gmra.mrb[0].mxu0 %v1522
  %v1582 = vpop.f32.mrb[0].mxu0
  %v1583 = vadd.f32 %v1486, %v1582
  %v1584 = vpop.f32.mrb[0].mxu0
  %v1585 = vpop.f32.mrb[0].mxu0
  %v1586 = vadd.f32 %v1486, %v1585
  %v1587 = vpop.f32.mrb[0].mxu0
  %1588 = vdwg.mxu0
  %1589 = vst.msk [vmem:[%s12] sm:$0xff] %vm84, %v1559
  %1590 = vst.msk [vmem:[%s12 + $0x8] sm:$0xff] %vm84, %v1562
  %1591 = vst.msk [vmem:[%s12 + $0x10] sm:$0xff] %vm84, %v1567
  %1592 = vst.msk [vmem:[%s12 + $0x18] sm:$0xff] %vm84, %v1570
  %1593 = vst.msk [vmem:[%s12 + $0x20] sm:$0xff] %vm84, %v1575
  %1594 = vst.msk [vmem:[%s12 + $0x28] sm:$0xff] %vm84, %v1578
  %1595 = vst.msk [vmem:[%s12 + $0x30] sm:$0xff] %vm84, %v1583
  %1596 = vst.msk [vmem:[%s12 + $0x38] sm:$0xff] %vm84, %v1586
  // Predicated region
  $region50: #{lstm_vae_forward.1} parent=0 // pred_check
    _
  $region51: #{lstm_vae_forward.1} parent=0 // pred_check_branch
    %1598 = sbr.rel (0) target = $region53
  $region52: #{lstm_vae_forward.1} parent=0 // pred_region
    _
  $region53: #{lstm_vae_forward.1} parent=0 // pred_fallthru
    _
  // Predicated region
  $region54: #{lstm_vae_forward.1} parent=0 // pred_check
    _
  $region55: #{lstm_vae_forward.1} parent=0 // pred_check_branch
    %1600 = sbr.rel (0) target = $region57
  $region56: #{lstm_vae_forward.1} parent=0 // pred_region
    _
  $region57: #{lstm_vae_forward.1} parent=0 // pred_fallthru
    _
  // Predicated region
  $region58: #{lstm_vae_forward.1} parent=0 // pred_check
    _
  $region59: #{lstm_vae_forward.1} parent=0 // pred_check_branch
    %1602 = sbr.rel (0) target = $region61
  $region60: #{lstm_vae_forward.1} parent=0 // pred_region
    _
  $region61: #{lstm_vae_forward.1} parent=0 // pred_fallthru
    _
  // Predicated region
  $region62: #{lstm_vae_forward.1} parent=0 // pred_check
    _
  $region63: #{lstm_vae_forward.1} parent=0 // pred_check_branch
    %1604 = sbr.rel (0) target = $region65
  $region64: #{lstm_vae_forward.1} parent=0 // pred_region
    _
  $region65: #{lstm_vae_forward.1} parent=0 // pred_fallthru
    _

</llo_original>
